<compile_context>
chip_gen: v5e
topology: v5e:2x2
jax: 0.10.0
libtpu: 0.0.40
codegen_flags: <defaults>
</compile_context>

<pallas_src>
import functools

import jax
import jax.numpy as jnp
from jax.experimental import pallas as pl
from jax.experimental.pallas import tpu as pltpu

# Set to jnp.bfloat16 on v6e/v7x for larger backbones (MXU is bf16-native);
# kept f32 here so the tiny-K convs match the f32 reference exactly.
_MXU_DTYPE = jnp.float32


# ----------------------------------------------------------------------------
# Fused kernel: conv3x3+ReLU -> conv3x3+ReLU -> global avg pool, BN images per
# grid step.  All activations are 2-D lane-packed (rows, width*channels); all
# heavy work (convs + pooling) is MXU matmuls; kh shifts are sublane rolls.
# ----------------------------------------------------------------------------
def _fused_encoder_kernel(x_ref, w1m_ref, b1_ref, rm_ref, w2m_ref, b2_ref,
                          prow_ref, pcol_ref, o_ref, *, Rb, BN):
    # x_ref   : (Rb, (W+4)*Cin)   BN images, rows = image-major, lanes = col*Cin+ci
    # w1m_ref : (3, (W+4)*Cin, (W+2)*C1)   banded conv1 weights (per kh)
    # b1_ref  : (1, (W+2)*C1)              conv1 bias row (zero on pad columns)
    # rm_ref  : (Rb, 1)                    row validity mask (zero on pad rows)
    # w2m_ref : (3, (W+2)*C1, W*C2)        banded conv2 weights (per kh)
    # b2_ref  : (1, W*C2)                  conv2 bias row
    # prow_ref: (8, Rb)                    per-image valid-row summation matrix
    # pcol_ref: (W*C2, C2)                 lane-fold matrix (carries 1/(H*W))
    # o_ref   : (BN, C2)                   pooled features for this block
    X = x_ref[...]

    # ---- conv1: sum over kh of (row-shifted X) @ banded weights.
    a1 = jnp.dot(X.astype(_MXU_DTYPE), w1m_ref[0].astype(_MXU_DTYPE),
                 preferred_element_type=jnp.float32)
    for kh in (1, 2):
        xs = pltpu.roll(X, shift=Rb - kh, axis=0)          # xs[r] = X[r + kh]
        a1 = a1 + jnp.dot(xs.astype(_MXU_DTYPE), w1m_ref[kh].astype(_MXU_DTYPE),
                          preferred_element_type=jnp.float32)
    # bias + ReLU + row mask -> h1 is exactly the 1-px zero-padded conv1 output.
    h1 = jnp.maximum(a1 + b1_ref[...], 0.0) * rm_ref[...]   # (Rb, (W+2)*C1)

    # ---- conv2: same banded-matmul structure on h1.
    a2 = jnp.dot(h1.astype(_MXU_DTYPE), w2m_ref[0].astype(_MXU_DTYPE),
                 preferred_element_type=jnp.float32)
    for kh in (1, 2):
        hs = pltpu.roll(h1, shift=Rb - kh, axis=0)
        a2 = a2 + jnp.dot(hs.astype(_MXU_DTYPE), w2m_ref[kh].astype(_MXU_DTYPE),
                          preferred_element_type=jnp.float32)
    h2 = jnp.maximum(a2 + b2_ref[...], 0.0)                  # (Rb, W*C2)

    # ---- global average pool ('avgpool' node), entirely on the MXU:
    # per-image sum over valid rows, then fold lanes j*C2+c -> c with 1/(H*W).
    s = jnp.dot(prow_ref[...], h2, preferred_element_type=jnp.float32)      # (8, W*C2)
    pooled = jnp.dot(s, pcol_ref[...], preferred_element_type=jnp.float32)  # (8, C2)
    o_ref[...] = pooled[:BN, :].astype(o_ref.dtype)


# ----------------------------------------------------------------------------
# Banded (block-Toeplitz) weight matrices for a 3x3/stride-1 conv in the
# lane-packed (rows, width*channels) layout.
# Returns (3, width_in*Cin, width_out*Cout); slice kh gives M_kh with
#   M_kh[(b+kw)*Cin + ci, b*Cout + co] = w[kh, kw, ci, co]
# for b in fill_positions (other output column-blocks stay zero, which folds
# the SAME-padding border of the *output* grid into the matmul).
# ----------------------------------------------------------------------------
def _banded_conv_matrix(w, width_in, width_out, fill_positions):
    _, _, cin, cout = w.shape
    mats = []
    for kh in range(3):
        kflat = w[kh].reshape(3 * cin, cout)                 # rows ordered (kw, ci)
        m = jnp.zeros((width_in * cin, width_out * cout), w.dtype)
        for b in fill_positions:
            m = m.at[b * cin:(b + 3) * cin, b * cout:(b + 1) * cout].set(kflat)
        mats.append(m)
    return jnp.stack(mats)


# ----------------------------------------------------------------------------
# FeatureEncoder forward:  encoder(x)['features'].view(len(x), -1)
# ----------------------------------------------------------------------------
def feature_encoder_forward(x_nchw, params):
    N, Cin, H, W = x_nchw.shape
    C1 = params["w1"].shape[-1]
    C2 = params["w2"].shape[-1]

    # Batch blocking: whole batch per step for small N (dense output block),
    # multiple-of-8 blocks otherwise.
    BN = N if N <= 8 else 8
    Npad = ((N + BN - 1) // BN) * BN
    G = Npad // BN
    Rb = BN * (H + 4)                 # rows per grid step
    L0 = (W + 4) * Cin                # input lanes
    L1 = (W + 2) * C1                 # conv1 (zero-padded) output lanes
    L2 = W * C2                       # conv2 output lanes

    # ---- input glue: NCHW -> NHWC, zero-pad by 2, lane-pack (rows, width*Cin).
    x = x_nchw.astype(jnp.float32)
    if Npad != N:
        x = jnp.pad(x, ((0, Npad - N), (0, 0), (0, 0), (0, 0)))
    xh = jnp.transpose(x, (0, 2, 3, 1))
    xp = jnp.pad(xh, ((0, 0), (2, 2), (2, 2), (0, 0)))
    X = xp.reshape(Npad * (H + 4), L0)

    # ---- weight-layout preparation (static given the weights; folds under jit).
    w1m = _banded_conv_matrix(params["w1"], W + 4, W + 2, range(1, W + 1))
    w2m = _banded_conv_matrix(params["w2"], W + 2, W, range(W))

    b1 = params["b1"].reshape(C1)
    b2 = params["b2"].reshape(C2)
    bvalid = ((jnp.arange(W + 2) >= 1) & (jnp.arange(W + 2) <= W)).astype(jnp.float32)
    b1_row = (bvalid[:, None] * b1[None, :]).reshape(1, L1)
    b2_row = jnp.tile(b2[None, :], (W, 1)).reshape(1, L2)

    a_local = jnp.arange(Rb) % (H + 4)
    rm = ((a_local >= 1) & (a_local <= H)).astype(jnp.float32)[:, None]      # (Rb, 1)

    prow = jnp.zeros((8, Rb), jnp.float32)                                    # padded to 8 rows
    for m in range(BN):
        prow = prow.at[m, m * (H + 4): m * (H + 4) + H].set(1.0)
    pcol = jnp.tile(jnp.eye(C2, dtype=jnp.float32), (W, 1)) * (1.0 / (H * W))  # (L2, C2)

    # ---- advisory cost estimate for the XLA scheduler.
    Rtot = Npad * (H + 4)
    flops = (2 * Rtot * 3 * L0 * L1) + (2 * Rtot * 3 * L1 * L2) \
        + G * (2 * 8 * Rb * L2 + 2 * 8 * L2 * C2)
    bytes_accessed = 4 * (Rtot * L0 + Npad * C2
                          + G * (3 * L0 * L1 + L1 + Rb + 3 * L1 * L2
                                 + L2 + 8 * Rb + L2 * C2))
    ce = pl.CostEstimate(flops=int(flops), transcendentals=0,
                         bytes_accessed=int(bytes_accessed))

    kernel = functools.partial(_fused_encoder_kernel, Rb=Rb, BN=BN)

    feats = pl.pallas_call(
        kernel,
        out_shape=jax.ShapeDtypeStruct((Npad, C2), jnp.float32),
        grid=(G,),
        in_specs=[
            pl.BlockSpec((Rb, L0), lambda g: (g, 0)),
            pl.BlockSpec((3, L0, L1), lambda g: (0, 0, 0)),
            pl.BlockSpec((1, L1), lambda g: (0, 0)),
            pl.BlockSpec((Rb, 1), lambda g: (0, 0)),
            pl.BlockSpec((3, L1, L2), lambda g: (0, 0, 0)),
            pl.BlockSpec((1, L2), lambda g: (0, 0)),
            pl.BlockSpec((8, Rb), lambda g: (0, 0)),
            pl.BlockSpec((L2, C2), lambda g: (0, 0)),
        ],
        out_specs=pl.BlockSpec((BN, C2), lambda g: (g, 0)),
        compiler_params=pltpu.CompilerParams(
            dimension_semantics=("parallel",)),     # v7x: grid steps across TCs
        cost_estimate=ce,
    )(X, w1m, b1_row, rm, w2m, b2_row, prow, pcol)

    return feats[:N].reshape(N, -1)                 # .view(len(x), -1)


def init_params(key, cin=4, c1=8, c2=32):
    k1, k2, k3, k4 = jax.random.split(key, 4)
    scale1 = 1.0 / jnp.sqrt(9.0 * cin)
    scale2 = 1.0 / jnp.sqrt(9.0 * c1)
    return {
        "w1": jax.random.normal(k1, (3, 3, cin, c1), jnp.float32) * scale1,
        "b1": jax.random.normal(k2, (1, c1), jnp.float32) * 0.01,
        "w2": jax.random.normal(k3, (3, 3, c1, c2), jnp.float32) * scale2,
        "b2": jax.random.normal(k4, (1, c2), jnp.float32) * 0.01,
    }


def ref_forward(x_nchw, p):
    xh = jnp.transpose(x_nchw, (0, 2, 3, 1))
    h = jax.lax.conv_general_dilated(
        xh, p["w1"], (1, 1), "SAME",
        dimension_numbers=("NHWC", "HWIO", "NHWC"),
        precision=jax.lax.Precision.HIGHEST) + p["b1"][0]
    h = jnp.maximum(h, 0.0)
    h = jax.lax.conv_general_dilated(
        h, p["w2"], (1, 1), "SAME",
        dimension_numbers=("NHWC", "HWIO", "NHWC"),
        precision=jax.lax.Precision.HIGHEST) + p["b2"][0]
    h = jnp.maximum(h, 0.0)
    return jnp.mean(h, axis=(1, 2)).reshape(x_nchw.shape[0], -1)


if __name__ == "__main__":
    key = jax.random.PRNGKey(0)
    kx, kp = jax.random.split(key)

    # Small shapes consistent with the module: batch=2, channels=4, 16x16 images.
    x = jax.random.normal(kx, (2, 4, 16, 16), jnp.float32)   # NCHW like PyTorch
    params = init_params(kp, cin=4, c1=8, c2=32)

    fwd = jax.jit(feature_encoder_forward)
    out = jax.block_until_ready(fwd(x, params))

    assert out.shape == (2, 32), out.shape
    assert out.dtype == jnp.float32

    ref = ref_forward(x, params)
    max_err = float(jnp.max(jnp.abs(out - ref)))
    assert jnp.allclose(out, ref, atol=1e-3, rtol=1e-3), max_err

    print("KERNEL_OK")
</pallas_src>

<mosaic_0001>
module attributes {stable_mosaic.version = 11 : i64} {
  func.func @_fused_encoder_kernel(%arg0: i32, %arg1: memref<40x80xf32, #tpu.memory_space<vmem>>, %arg2: memref<3x80x144xf32, #tpu.memory_space<vmem>>, %arg3: memref<1x144xf32, #tpu.memory_space<vmem>>, %arg4: memref<40x1xf32, #tpu.memory_space<vmem>>, %arg5: memref<3x144x512xf32, #tpu.memory_space<vmem>>, %arg6: memref<1x512xf32, #tpu.memory_space<vmem>>, %arg7: memref<8x40xf32, #tpu.memory_space<vmem>>, %arg8: memref<512x32xf32, #tpu.memory_space<vmem>>, %arg9: memref<2x32xf32, #tpu.memory_space<vmem>>) attributes {dimension_semantics = [#tpu.dimension_semantics<parallel>], iteration_bounds = array<i64: 1>, scalar_prefetch = 0 : i64, scratch_operands = 0 : i64, tpu.core_type = #tpu.core_type<tc>, window_params = [{transform_indices = @transform_0, window_bounds = array<i64: 40, 80>}, {pipeline_mode = #tpu.pipeline_mode<synchronous>, transform_indices = @transform_1, window_bounds = array<i64: 3, 80, 144>}, {pipeline_mode = #tpu.pipeline_mode<synchronous>, transform_indices = @transform_2, window_bounds = array<i64: 1, 144>}, {pipeline_mode = #tpu.pipeline_mode<synchronous>, transform_indices = @transform_3, window_bounds = array<i64: 40, 1>}, {pipeline_mode = #tpu.pipeline_mode<synchronous>, transform_indices = @transform_4, window_bounds = array<i64: 3, 144, 512>}, {pipeline_mode = #tpu.pipeline_mode<synchronous>, transform_indices = @transform_5, window_bounds = array<i64: 1, 512>}, {pipeline_mode = #tpu.pipeline_mode<synchronous>, transform_indices = @transform_6, window_bounds = array<i64: 8, 40>}, {pipeline_mode = #tpu.pipeline_mode<synchronous>, transform_indices = @transform_7, window_bounds = array<i64: 512, 32>}, {transform_indices = @transform_8, window_bounds = array<i64: 2, 32>}]} {
    %c0 = arith.constant 0 : index
    %c0_0 = arith.constant 0 : index
    %0 = vector.load %arg1[%c0, %c0_0] : memref<40x80xf32, #tpu.memory_space<vmem>>, vector<40x80xf32>
    %c0_1 = arith.constant 0 : index
    %c0_2 = arith.constant 0 : index
    %c0_3 = arith.constant 0 : index
    %1 = vector.load %arg2[%c0_1, %c0_2, %c0_3] : memref<3x80x144xf32, #tpu.memory_space<vmem>>, vector<1x80x144xf32>
    %2 = vector.shape_cast %1 : vector<1x80x144xf32> to vector<80x144xf32>
    %cst = arith.constant dense<0.000000e+00> : vector<40x144xf32>
    %3 = tpu.matmul %0, %2, %cst {dimension_numbers = #tpu.dot_dimension_numbers<[1], [0], [0], [1], [0, 0, 1, 1], [], []>} : vector<40x80xf32>, vector<80x144xf32>, vector<40x144xf32> -> vector<40x144xf32>
    %c39_i32 = arith.constant 39 : i32
    %4 = tpu.dynamic_rotate %0 by %c39_i32 dim 0 : vector<40x80xf32>, i32 -> vector<40x80xf32>
    %c1 = arith.constant 1 : index
    %c0_4 = arith.constant 0 : index
    %c0_5 = arith.constant 0 : index
    %5 = vector.load %arg2[%c1, %c0_4, %c0_5] : memref<3x80x144xf32, #tpu.memory_space<vmem>>, vector<1x80x144xf32>
    %6 = vector.shape_cast %5 : vector<1x80x144xf32> to vector<80x144xf32>
    %cst_6 = arith.constant dense<0.000000e+00> : vector<40x144xf32>
    %7 = tpu.matmul %4, %6, %cst_6 {dimension_numbers = #tpu.dot_dimension_numbers<[1], [0], [0], [1], [0, 0, 1, 1], [], []>} : vector<40x80xf32>, vector<80x144xf32>, vector<40x144xf32> -> vector<40x144xf32>
    %8 = arith.addf %3, %7 : vector<40x144xf32>
    %c38_i32 = arith.constant 38 : i32
    %9 = tpu.dynamic_rotate %0 by %c38_i32 dim 0 : vector<40x80xf32>, i32 -> vector<40x80xf32>
    %c2 = arith.constant 2 : index
    %c0_7 = arith.constant 0 : index
    %c0_8 = arith.constant 0 : index
    %10 = vector.load %arg2[%c2, %c0_7, %c0_8] : memref<3x80x144xf32, #tpu.memory_space<vmem>>, vector<1x80x144xf32>
    %11 = vector.shape_cast %10 : vector<1x80x144xf32> to vector<80x144xf32>
    %cst_9 = arith.constant dense<0.000000e+00> : vector<40x144xf32>
    %12 = tpu.matmul %9, %11, %cst_9 {dimension_numbers = #tpu.dot_dimension_numbers<[1], [0], [0], [1], [0, 0, 1, 1], [], []>} : vector<40x80xf32>, vector<80x144xf32>, vector<40x144xf32> -> vector<40x144xf32>
    %13 = arith.addf %8, %12 : vector<40x144xf32>
    %c0_10 = arith.constant 0 : index
    %c0_11 = arith.constant 0 : index
    %14 = vector.load %arg3[%c0_10, %c0_11] : memref<1x144xf32, #tpu.memory_space<vmem>>, vector<1x144xf32>
    %15 = vector.broadcast %14 : vector<1x144xf32> to vector<40x144xf32>
    %16 = arith.addf %13, %15 : vector<40x144xf32>
    %cst_12 = arith.constant 0.000000e+00 : f32
    %17 = vector.broadcast %cst_12 : f32 to vector<40x144xf32>
    %18 = arith.maximumf %16, %17 : vector<40x144xf32>
    %c0_13 = arith.constant 0 : index
    %c0_14 = arith.constant 0 : index
    %19 = vector.load %arg4[%c0_13, %c0_14] : memref<40x1xf32, #tpu.memory_space<vmem>>, vector<40x1xf32>
    %20 = vector.broadcast %19 : vector<40x1xf32> to vector<40x144xf32>
    %21 = arith.mulf %18, %20 : vector<40x144xf32>
    %c0_15 = arith.constant 0 : index
    %c0_16 = arith.constant 0 : index
    %c0_17 = arith.constant 0 : index
    %22 = vector.load %arg5[%c0_15, %c0_16, %c0_17] : memref<3x144x512xf32, #tpu.memory_space<vmem>>, vector<1x144x512xf32>
    %23 = vector.shape_cast %22 : vector<1x144x512xf32> to vector<144x512xf32>
    %cst_18 = arith.constant dense<0.000000e+00> : vector<40x512xf32>
    %24 = tpu.matmul %21, %23, %cst_18 {dimension_numbers = #tpu.dot_dimension_numbers<[1], [0], [0], [1], [0, 0, 1, 1], [], []>} : vector<40x144xf32>, vector<144x512xf32>, vector<40x512xf32> -> vector<40x512xf32>
    %c39_i32_19 = arith.constant 39 : i32
    %25 = tpu.dynamic_rotate %21 by %c39_i32_19 dim 0 : vector<40x144xf32>, i32 -> vector<40x144xf32>
    %c1_20 = arith.constant 1 : index
    %c0_21 = arith.constant 0 : index
    %c0_22 = arith.constant 0 : index
    %26 = vector.load %arg5[%c1_20, %c0_21, %c0_22] : memref<3x144x512xf32, #tpu.memory_space<vmem>>, vector<1x144x512xf32>
    %27 = vector.shape_cast %26 : vector<1x144x512xf32> to vector<144x512xf32>
    %cst_23 = arith.constant dense<0.000000e+00> : vector<40x512xf32>
    %28 = tpu.matmul %25, %27, %cst_23 {dimension_numbers = #tpu.dot_dimension_numbers<[1], [0], [0], [1], [0, 0, 1, 1], [], []>} : vector<40x144xf32>, vector<144x512xf32>, vector<40x512xf32> -> vector<40x512xf32>
    %29 = arith.addf %24, %28 : vector<40x512xf32>
    %c38_i32_24 = arith.constant 38 : i32
    %30 = tpu.dynamic_rotate %21 by %c38_i32_24 dim 0 : vector<40x144xf32>, i32 -> vector<40x144xf32>
    %c2_25 = arith.constant 2 : index
    %c0_26 = arith.constant 0 : index
    %c0_27 = arith.constant 0 : index
    %31 = vector.load %arg5[%c2_25, %c0_26, %c0_27] : memref<3x144x512xf32, #tpu.memory_space<vmem>>, vector<1x144x512xf32>
    %32 = vector.shape_cast %31 : vector<1x144x512xf32> to vector<144x512xf32>
    %cst_28 = arith.constant dense<0.000000e+00> : vector<40x512xf32>
    %33 = tpu.matmul %30, %32, %cst_28 {dimension_numbers = #tpu.dot_dimension_numbers<[1], [0], [0], [1], [0, 0, 1, 1], [], []>} : vector<40x144xf32>, vector<144x512xf32>, vector<40x512xf32> -> vector<40x512xf32>
    %34 = arith.addf %29, %33 : vector<40x512xf32>
    %c0_29 = arith.constant 0 : index
    %c0_30 = arith.constant 0 : index
    %35 = vector.load %arg6[%c0_29, %c0_30] : memref<1x512xf32, #tpu.memory_space<vmem>>, vector<1x512xf32>
    %36 = vector.broadcast %35 : vector<1x512xf32> to vector<40x512xf32>
    %37 = arith.addf %34, %36 : vector<40x512xf32>
    %cst_31 = arith.constant 0.000000e+00 : f32
    %38 = vector.broadcast %cst_31 : f32 to vector<40x512xf32>
    %39 = arith.maximumf %37, %38 : vector<40x512xf32>
    %c0_32 = arith.constant 0 : index
    %c0_33 = arith.constant 0 : index
    %40 = vector.load %arg7[%c0_32, %c0_33] : memref<8x40xf32, #tpu.memory_space<vmem>>, vector<8x40xf32>
    %cst_34 = arith.constant dense<0.000000e+00> : vector<8x512xf32>
    %41 = tpu.matmul %40, %39, %cst_34 {dimension_numbers = #tpu.dot_dimension_numbers<[1], [0], [0], [1], [0, 0, 1, 1], [], []>} : vector<8x40xf32>, vector<40x512xf32>, vector<8x512xf32> -> vector<8x512xf32>
    %c0_35 = arith.constant 0 : index
    %c0_36 = arith.constant 0 : index
    %42 = vector.load %arg8[%c0_35, %c0_36] : memref<512x32xf32, #tpu.memory_space<vmem>>, vector<512x32xf32>
    %cst_37 = arith.constant dense<0.000000e+00> : vector<8x32xf32>
    %43 = tpu.matmul %41, %42, %cst_37 {dimension_numbers = #tpu.dot_dimension_numbers<[1], [0], [0], [1], [0, 0, 1, 1], [], []>} : vector<8x512xf32>, vector<512x32xf32>, vector<8x32xf32> -> vector<8x32xf32>
    %44 = vector.extract_strided_slice %43 {offsets = [0, 0], sizes = [2, 32], strides = [1, 1]} : vector<8x32xf32> to vector<2x32xf32>
    %c0_38 = arith.constant 0 : index
    %c0_39 = arith.constant 0 : index
    %45 = vector.load %arg9[%c0_38, %c0_39] : memref<2x32xf32, #tpu.memory_space<vmem>>, vector<2x32xf32>
    tpu.vector_store %arg9[%c0_38, %c0_39], %44 {strides = array<i32>} : memref<2x32xf32, #tpu.memory_space<vmem>>, vector<2x32xf32>,
    return
  }
  func.func @transform_0(%arg0: i32) -> (i32, i32) {
    %c0_i32 = arith.constant 0 : i32
    %c0_i32_0 = arith.constant 0 : i32
    return %arg0, %c0_i32 : i32, i32
  }
  func.func @transform_1(%arg0: i32) -> (i32, i32, i32) {
    %c0_i32 = arith.constant 0 : i32
    %c0_i32_0 = arith.constant 0 : i32
    %c0_i32_1 = arith.constant 0 : i32
    %c0_i32_2 = arith.constant 0 : i32
    return %c0_i32, %c0_i32_0, %c0_i32_1 : i32, i32, i32
  }
  func.func @transform_2(%arg0: i32) -> (i32, i32) {
    %c0_i32 = arith.constant 0 : i32
    %c0_i32_0 = arith.constant 0 : i32
    %c0_i32_1 = arith.constant 0 : i32
    return %c0_i32, %c0_i32_0 : i32, i32
  }
  func.func @transform_3(%arg0: i32) -> (i32, i32) {
    %c0_i32 = arith.constant 0 : i32
    %c0_i32_0 = arith.constant 0 : i32
    %c0_i32_1 = arith.constant 0 : i32
    return %c0_i32, %c0_i32_0 : i32, i32
  }
  func.func @transform_4(%arg0: i32) -> (i32, i32, i32) {
    %c0_i32 = arith.constant 0 : i32
    %c0_i32_0 = arith.constant 0 : i32
    %c0_i32_1 = arith.constant 0 : i32
    %c0_i32_2 = arith.constant 0 : i32
    return %c0_i32, %c0_i32_0, %c0_i32_1 : i32, i32, i32
  }
  func.func @transform_5(%arg0: i32) -> (i32, i32) {
    %c0_i32 = arith.constant 0 : i32
    %c0_i32_0 = arith.constant 0 : i32
    %c0_i32_1 = arith.constant 0 : i32
    return %c0_i32, %c0_i32_0 : i32, i32
  }
  func.func @transform_6(%arg0: i32) -> (i32, i32) {
    %c0_i32 = arith.constant 0 : i32
    %c0_i32_0 = arith.constant 0 : i32
    %c0_i32_1 = arith.constant 0 : i32
    return %c0_i32, %c0_i32_0 : i32, i32
  }
  func.func @transform_7(%arg0: i32) -> (i32, i32) {
    %c0_i32 = arith.constant 0 : i32
    %c0_i32_0 = arith.constant 0 : i32
    %c0_i32_1 = arith.constant 0 : i32
    return %c0_i32, %c0_i32_0 : i32, i32
  }
  func.func @transform_8(%arg0: i32) -> (i32, i32) {
    %c0_i32 = arith.constant 0 : i32
    %c0_i32_0 = arith.constant 0 : i32
    return %arg0, %c0_i32 : i32, i32
  }
}

</mosaic_0001>

<llo_original>
// kernel: tile.11
$region0: #{tile.11}
  #allocation0 [shape = 's32[1]{0}', space=sflag, size = 0x4, scoped, tag = 'scoped memory for tile.11']
  %s0 = inlined_call_operand.vmem [shape: f32[32], index: 0, kind: input, shape index: {}]
  %s1 = inlined_call_operand.vmem [shape: f32[16,1,1,32], index: 1, kind: output, shape index: {}]
  // Predicated region
  $region2: #{tile.11} parent=0 // pred_check
    _
  $region3: #{tile.11} parent=0 // pred_check_branch
    %3 = sbr.rel (0) target = $region5
  $region4: #{tile.11} parent=0 // pred_region
    _
  $region5: #{tile.11} parent=0 // pred_fallthru
    _
  %v4 = vld [vmem:[%s0] ss:$0 sm:$0xff]
  %5 = vst [vmem:[%s1] sm:$0xff] %v4
  %s6 = scalar_lea.vmem %s1, 8
  %7 = vst [vmem:[%s6] sm:$0xff] %v4

// kernel: tile.12
$region0: #{tile.12}
  %s0 = inlined_call_operand.vmem [shape: f32[16,1,1,32], index: 0, kind: input, shape index: {}]
  %s1 = inlined_call_operand.vmem [shape: f32[1,512], index: 1, kind: output, shape index: {}]
  $region1: #{tile.12} parent=0
    #allocation0 [shape = 'u8[16384]{0}', space=vmem, size = 0x4000, scoped, tag = 'scoped mem for output reshape']
    %v2 = vld [vmem:[%s0] ss:$4 sm:$0xf]
    %vm3 = vcmask 261120
    %4 = vst.msk [vmem:[#allocation0] ss:$8 sm:$0xf] %vm3, %v2
    %s5 = scalar_lea.vmem %s0, 3
    %v6 = vld [vmem:[%s5] ss:$4 sm:$0xf]
    %7 = vrot.lane.b32.xlu0 %v6, 96
    %v8 = vpop.permute.xlu0 %7
    %vm9 = vcmask 1048320
    %10 = vst.msk [vmem:[#allocation0] ss:$8 sm:$0xf] %vm9, %v8
    %s11 = scalar_lea.vmem %s0, 2
    %v12 = vld [vmem:[%s11] ss:$4 sm:$0xf]
    %13 = vrot.lane.b32.xlu0 %v12, 64
    %v14 = vpop.permute.xlu0 %13
    %vm15 = vcmask 785920
    %16 = vst.msk [vmem:[#allocation0] ss:$8 sm:$0xf] %vm15, %v14
    %s17 = scalar_lea.vmem %s0, 1
    %v18 = vld [vmem:[%s17] ss:$4 sm:$0xf]
    %19 = vrot.lane.b32.xlu0 %v18, 32
    %v20 = vpop.permute.xlu0 %19
    %vm21 = vcmask 523520
    %22 = vst.msk [vmem:[#allocation0] ss:$8 sm:$0xf] %vm21, %v20
    %s24 = ssub.s32 2, 1
    %v25 = vld [vmem:[#allocation0] sm:%s24]
    %s27 = ssub.s32 2, 1
    %28 = vst [vmem:[%s1] sm:%s27] %v25
    %s29 = scalar_lea.vmem [#allocation0], 8
    %v30 = vld [vmem:[%s29] sm:%s24]
    %s32 = ssub.s32 2, 1
    %s33 = scalar_lea.vmem %s1, 1
    %34 = vst [vmem:[%s33] sm:%s32] %v30
    %s35 = scalar_lea.vmem [#allocation0], 16
    %v36 = vld [vmem:[%s35] sm:%s24]
    %s38 = ssub.s32 2, 1
    %s39 = scalar_lea.vmem %s1, 2
    %40 = vst [vmem:[%s39] sm:%s38] %v36
    %s41 = scalar_lea.vmem [#allocation0], 24
    %v42 = vld [vmem:[%s41] sm:%s24]
    %s44 = ssub.s32 2, 1
    %s45 = scalar_lea.vmem %s1, 3
    %46 = vst [vmem:[%s45] sm:%s44] %v42

// kernel: feature_encoder_forward.1
$region0: #{feature_encoder_forward.1}
  #allocation0 [shape = 'u32[]', space=smem, size = 0x4, offset = 0x4, fixed_abs, tag = 'smem constant byte address 0x4 - core index']
  #allocation1 [shape = 'u32[72,128]{1,0:T(1,128)}', space=vmem, size = 0x9000, scoped, tag = 'internal scratch']
  %s0 = inlined_call_operand.vmem [shape: f32[40,80], index: 0, kind: input, shape index: {}]
  %s1 = inlined_call_operand.vmem [shape: f32[3,80,144], index: 1, kind: input, shape index: {}]
  %s2 = inlined_call_operand.vmem [shape: f32[1,144], index: 2, kind: input, shape index: {}]
  %s3 = inlined_call_operand.vmem [shape: f32[40,1], index: 3, kind: input, shape index: {}]
  %s4 = inlined_call_operand.vmem [shape: f32[3,144,512], index: 4, kind: input, shape index: {}]
  %s5 = inlined_call_operand.vmem [shape: f32[1,512], index: 5, kind: input, shape index: {}]
  %s6 = inlined_call_operand.vmem [shape: f32[8,40], index: 6, kind: input, shape index: {}]
  %s7 = inlined_call_operand.vmem [shape: f32[512,32], index: 7, kind: input, shape index: {}]
  %s8 = inlined_call_operand.hbm [shape: f32[2,32], index: 8, kind: output, shape index: {}]
  %s9 = sld [smem:[#allocation0]]
  $region42: #{feature_encoder_forward.1} parent=0
    _
  %s11 = ssub.s32 1, %s9
  %s12 = scalar_select 0, %s11, %s9
  $region1: #{feature_encoder_forward.1} parent=0
    #allocation2 [shape = 'u8[1024]{0}', space=vmem, size = 0x400, scoped, tag = 'output window, operand 0, single buffered']
    #allocation3 [shape = 's32[1]{0}', space=sflag, size = 0x4, scoped, tag = 'scoped memory for feature_encoder_forward.1']
    %13 = vsyncpa [#allocation3], 0
    // Predicated region
    $region2: #{feature_encoder_forward.1} parent=1 // pred_check
      _
    $region3: #{feature_encoder_forward.1} parent=1 // pred_check_branch
      %15 = sbr.rel (0) target = $region5
    $region4: #{feature_encoder_forward.1} parent=1 // pred_region
      _
    $region5: #{feature_encoder_forward.1} parent=1 // pred_fallthru
      _
    // Predicated region
    $region6: #{feature_encoder_forward.1} parent=1 // pred_check
      _
    $region7: #{feature_encoder_forward.1} parent=1 // pred_check_branch
      %17 = sbr.rel (0) target = $region9
    $region8: #{feature_encoder_forward.1} parent=1 // pred_region
      _
    $region9: #{feature_encoder_forward.1} parent=1 // pred_fallthru
      _
    // Predicated region
    $region10: #{feature_encoder_forward.1} parent=1 // pred_check
      _
    $region11: #{feature_encoder_forward.1} parent=1 // pred_check_branch
      %19 = sbr.rel (0) target = $region13
    $region12: #{feature_encoder_forward.1} parent=1 // pred_region
      _
    $region13: #{feature_encoder_forward.1} parent=1 // pred_fallthru
      _
    // Predicated region
    $region14: #{feature_encoder_forward.1} parent=1 // pred_check
      _
    $region15: #{feature_encoder_forward.1} parent=1 // pred_check_branch
      %21 = sbr.rel (0) target = $region17
    $region16: #{feature_encoder_forward.1} parent=1 // pred_region
      _
    $region17: #{feature_encoder_forward.1} parent=1 // pred_fallthru
      _
    // Predicated region
    $region18: #{feature_encoder_forward.1} parent=1 // pred_check
      _
    $region19: #{feature_encoder_forward.1} parent=1 // pred_check_branch
      %23 = sbr.rel (0) target = $region21
    $region20: #{feature_encoder_forward.1} parent=1 // pred_region
      _
    $region21: #{feature_encoder_forward.1} parent=1 // pred_fallthru
      _
    // Predicated region
    $region22: #{feature_encoder_forward.1} parent=1 // pred_check
      _
    $region23: #{feature_encoder_forward.1} parent=1 // pred_check_branch
      %25 = sbr.rel (0) target = $region25
    $region24: #{feature_encoder_forward.1} parent=1 // pred_region
      _
    $region25: #{feature_encoder_forward.1} parent=1 // pred_fallthru
      _
    // Predicated region
    $region26: #{feature_encoder_forward.1} parent=1 // pred_check
      _
    $region27: #{feature_encoder_forward.1} parent=1 // pred_check_branch
      %27 = sbr.rel (0) target = $region29
    $region28: #{feature_encoder_forward.1} parent=1 // pred_region
      _
    $region29: #{feature_encoder_forward.1} parent=1 // pred_fallthru
      _
    // Predicated region
    $region30: #{feature_encoder_forward.1} parent=1 // pred_check
      _
    $region31: #{feature_encoder_forward.1} parent=1 // pred_check_branch
      %29 = sbr.rel (0) target = $region33
    $region32: #{feature_encoder_forward.1} parent=1 // pred_region
      _
    $region33: #{feature_encoder_forward.1} parent=1 // pred_fallthru
      _
    %v30 = vld [vmem:[%s0] sm:$0xff]
    %v31 = vld [vmem:[%s0 + $0x8] sm:$0xff]
    %v32 = vld [vmem:[%s0 + $0x10] sm:$0xff]
    %v33 = vld [vmem:[%s0 + $0x18] sm:$0xff]
    %v34 = vld [vmem:[%s0 + $0x20] sm:$0xff]
    %v35 = vld [vmem:[%s1] sm:$0xff]
    %v36 = vld [vmem:[%s1 + $0x8] sm:$0xff]
    %v37 = vld [vmem:[%s1 + $0x10] sm:$0xff]
    %v38 = vld [vmem:[%s1 + $0x18] sm:$0xff]
    %v39 = vld [vmem:[%s1 + $0x20] sm:$0xff]
    %v40 = vld [vmem:[%s1 + $0x28] sm:$0xff]
    %v41 = vld [vmem:[%s1 + $0x30] sm:$0xff]
    %v42 = vld [vmem:[%s1 + $0x38] sm:$0xff]
    %v43 = vld [vmem:[%s1 + $0x40] sm:$0xff]
    %v44 = vld [vmem:[%s1 + $0x48] sm:$0xff]
    %v45 = vld [vmem:[%s1 + $0x50] sm:$0xff]
    %v46 = vld [vmem:[%s1 + $0x58] sm:$0xff]
    %v47 = vld [vmem:[%s1 + $0x60] sm:$0xff]
    %v48 = vld [vmem:[%s1 + $0x68] sm:$0xff]
    %v49 = vld [vmem:[%s1 + $0x70] sm:$0xff]
    %v50 = vld [vmem:[%s1 + $0x78] sm:$0xff]
    %v51 = vld [vmem:[%s1 + $0x80] sm:$0xff]
    %v52 = vld [vmem:[%s1 + $0x88] sm:$0xff]
    %v53 = vld [vmem:[%s1 + $0x90] sm:$0xff]
    %v54 = vld [vmem:[%s1 + $0x98] sm:$0xff]
    %v55 = vrot.slane %v30, 1
    %v56 = vrot.slane %v31, 1
    %v57 = vrot.slane %v32, 1
    %v58 = vrot.slane %v33, 1
    %v59 = vrot.slane %v34, 1
    %v60 = vlaneseq
    %v61 = vshrl.u32 %v60, 7
    %vm62 = vcmp.lt.s32.totalorder %v61, 7
    %v63 = vsel %vm62, %v58, %v59
    %v64 = vsel %vm62, %v57, %v58
    %v65 = vsel %vm62, %v56, %v57
    %v66 = vsel %vm62, %v55, %v56
    %v67 = vsel %vm62, %v59, %v55
    %s68 = scalar_lea.vmem %s1, 160
    %v69 = vld [vmem:[%s68] sm:$0xff]
    %v70 = vld [vmem:[%s68 + $0x8] sm:$0xff]
    %v71 = vld [vmem:[%s68 + $0x10] sm:$0xff]
    %v72 = vld [vmem:[%s68 + $0x18] sm:$0xff]
    %v73 = vld [vmem:[%s68 + $0x20] sm:$0xff]
    %v74 = vld [vmem:[%s68 + $0x28] sm:$0xff]
    %v75 = vld [vmem:[%s68 + $0x30] sm:$0xff]
    %v76 = vld [vmem:[%s68 + $0x38] sm:$0xff]
    %v77 = vld [vmem:[%s68 + $0x40] sm:$0xff]
    %v78 = vld [vmem:[%s68 + $0x48] sm:$0xff]
    %v79 = vld [vmem:[%s68 + $0x50] sm:$0xff]
    %v80 = vld [vmem:[%s68 + $0x58] sm:$0xff]
    %v81 = vld [vmem:[%s68 + $0x60] sm:$0xff]
    %v82 = vld [vmem:[%s68 + $0x68] sm:$0xff]
    %v83 = vld [vmem:[%s68 + $0x70] sm:$0xff]
    %v84 = vld [vmem:[%s68 + $0x78] sm:$0xff]
    %v85 = vld [vmem:[%s68 + $0x80] sm:$0xff]
    %v86 = vld [vmem:[%s68 + $0x88] sm:$0xff]
    %v87 = vld [vmem:[%s68 + $0x90] sm:$0xff]
    %v88 = vld [vmem:[%s68 + $0x98] sm:$0xff]
    %vm89 = vcmask 654336
    %v91 = vsel %vm89, %v66, 0
    %v94 = vsel %vm89, %v65, 0
    %v97 = vsel %vm89, %v64, 0
    %v100 = vsel %vm89, %v63, 0
    %v103 = vsel %vm89, %v67, 0
    %105 = vmatpush.msra.mxu0 0.0
    %106 = vmatpush.msra.mxu0 0.0
    %107 = vmatpush.msra.mxu0 0.0
    %108 = vmatpush.msra.mxu0 0.0
    %109 = vmatpush.msra.mxu0 0.0
    %110 = vmatpush.msra.mxu0 0.0
    %111 = vmatpush.msra.mxu0 %v87
    %112 = vmatpush.msra.mxu0 %v85
    %113 = vmatpush.msra.mxu0 %v83
    %114 = vmatpush.msra.mxu0 %v81
    %115 = vmatpush.msra.mxu0 %v79
    %116 = vmatpush.msra.mxu0 %v77
    %117 = vmatpush.msra.mxu0 %v75
    %118 = vmatpush.msra.mxu0 %v73
    %119 = vmatpush.msra.mxu0 %v71
    %120 = vmatpush.msra.mxu0 %v69
    %121 = vmatmul.f32.gmra.mxu0 %v91
    %v122 = vpop.f32.mrf.mxu0
    %v123 = vadd.f32 0.0, %v122
    %124 = vmatmul.f32.gmra.mxu0 %v94
    %v125 = vpop.f32.mrf.mxu0
    %v126 = vadd.f32 0.0, %v125
    %127 = vmatmul.f32.gmra.mxu0 %v97
    %v128 = vpop.f32.mrf.mxu0
    %v129 = vadd.f32 0.0, %v128
    %130 = vmatmul.f32.gmra.mxu0 %v100
    %v131 = vpop.f32.mrf.mxu0
    %v132 = vadd.f32 0.0, %v131
    %133 = vmatmul.f32.gmra.mxu0 %v103
    %v134 = vpop.f32.mrf.mxu0
    %v135 = vadd.f32 0.0, %v134
    %136 = vdwg.mxu0
    %137 = vmatpush.msra.mxu0 0.0
    %138 = vmatpush.msra.mxu0 0.0
    %139 = vmatpush.msra.mxu0 0.0
    %140 = vmatpush.msra.mxu0 0.0
    %141 = vmatpush.msra.mxu0 0.0
    %142 = vmatpush.msra.mxu0 0.0
    %143 = vmatpush.msra.mxu0 %v88
    %144 = vmatpush.msra.mxu0 %v86
    %145 = vmatpush.msra.mxu0 %v84
    %146 = vmatpush.msra.mxu0 %v82
    %147 = vmatpush.msra.mxu0 %v80
    %148 = vmatpush.msra.mxu0 %v78
    %149 = vmatpush.msra.mxu0 %v76
    %150 = vmatpush.msra.mxu0 %v74
    %151 = vmatpush.msra.mxu0 %v72
    %152 = vmatpush.msra.mxu0 %v70
    %153 = vmatmul.f32.gmra.mxu0 %v91
    %v154 = vpop.f32.mrf.mxu0
    %v155 = vadd.f32 0.0, %v154
    %156 = vmatmul.f32.gmra.mxu0 %v94
    %v157 = vpop.f32.mrf.mxu0
    %v158 = vadd.f32 0.0, %v157
    %159 = vmatmul.f32.gmra.mxu0 %v97
    %v160 = vpop.f32.mrf.mxu0
    %v161 = vadd.f32 0.0, %v160
    %162 = vmatmul.f32.gmra.mxu0 %v100
    %v163 = vpop.f32.mrf.mxu0
    %v164 = vadd.f32 0.0, %v163
    %165 = vmatmul.f32.gmra.mxu0 %v103
    %v166 = vpop.f32.mrf.mxu0
    %v167 = vadd.f32 0.0, %v166
    %168 = vdwg.mxu0
    %v170 = vsel %vm89, %v30, 0
    %v173 = vsel %vm89, %v31, 0
    %v176 = vsel %vm89, %v32, 0
    %v179 = vsel %vm89, %v33, 0
    %v182 = vsel %vm89, %v34, 0
    %184 = vmatpush.msra.mxu0 0.0
    %185 = vmatpush.msra.mxu0 0.0
    %186 = vmatpush.msra.mxu0 0.0
    %187 = vmatpush.msra.mxu0 0.0
    %188 = vmatpush.msra.mxu0 0.0
    %189 = vmatpush.msra.mxu0 0.0
    %190 = vmatpush.msra.mxu0 %v53
    %191 = vmatpush.msra.mxu0 %v51
    %192 = vmatpush.msra.mxu0 %v49
    %193 = vmatpush.msra.mxu0 %v47
    %194 = vmatpush.msra.mxu0 %v45
    %195 = vmatpush.msra.mxu0 %v43
    %196 = vmatpush.msra.mxu0 %v41
    %197 = vmatpush.msra.mxu0 %v39
    %198 = vmatpush.msra.mxu0 %v37
    %199 = vmatpush.msra.mxu0 %v35
    %200 = vmatmul.f32.gmra.mxu0 %v170
    %v201 = vpop.f32.mrf.mxu0
    %v202 = vadd.f32 %v123, %v201
    %203 = vmatmul.f32.gmra.mxu0 %v173
    %v204 = vpop.f32.mrf.mxu0
    %v205 = vadd.f32 %v126, %v204
    %206 = vmatmul.f32.gmra.mxu0 %v176
    %v207 = vpop.f32.mrf.mxu0
    %v208 = vadd.f32 %v129, %v207
    %209 = vmatmul.f32.gmra.mxu0 %v179
    %v210 = vpop.f32.mrf.mxu0
    %v211 = vadd.f32 %v132, %v210
    %212 = vmatmul.f32.gmra.mxu0 %v182
    %v213 = vpop.f32.mrf.mxu0
    %v214 = vadd.f32 %v135, %v213
    %215 = vdwg.mxu0
    %216 = vmatpush.msra.mxu0 0.0
    %217 = vmatpush.msra.mxu0 0.0
    %218 = vmatpush.msra.mxu0 0.0
    %219 = vmatpush.msra.mxu0 0.0
    %220 = vmatpush.msra.mxu0 0.0
    %221 = vmatpush.msra.mxu0 0.0
    %222 = vmatpush.msra.mxu0 %v54
    %223 = vmatpush.msra.mxu0 %v52
    %224 = vmatpush.msra.mxu0 %v50
    %225 = vmatpush.msra.mxu0 %v48
    %226 = vmatpush.msra.mxu0 %v46
    %227 = vmatpush.msra.mxu0 %v44
    %228 = vmatpush.msra.mxu0 %v42
    %229 = vmatpush.msra.mxu0 %v40
    %230 = vmatpush.msra.mxu0 %v38
    %231 = vmatpush.msra.mxu0 %v36
    %232 = vmatmul.f32.gmra.mxu0 %v170
    %v233 = vpop.f32.mrf.mxu0
    %v234 = vadd.f32 %v155, %v233
    %235 = vmatmul.f32.gmra.mxu0 %v173
    %v236 = vpop.f32.mrf.mxu0
    %v237 = vadd.f32 %v158, %v236
    %238 = vmatmul.f32.gmra.mxu0 %v176
    %v239 = vpop.f32.mrf.mxu0
    %v240 = vadd.f32 %v161, %v239
    %241 = vmatmul.f32.gmra.mxu0 %v179
    %v242 = vpop.f32.mrf.mxu0
    %v243 = vadd.f32 %v164, %v242
    %244 = vmatmul.f32.gmra.mxu0 %v182
    %v245 = vpop.f32.mrf.mxu0
    %v246 = vadd.f32 %v167, %v245
    %247 = vdwg.mxu0
    %v248 = vrot.slane %v30, 2
    %v249 = vrot.slane %v31, 2
    %v250 = vrot.slane %v32, 2
    %v251 = vrot.slane %v33, 2
    %v252 = vrot.slane %v34, 2
    %vm253 = vcmp.lt.s32.totalorder %v61, 6
    %v254 = vsel %vm253, %v251, %v252
    %v255 = vsel %vm253, %v250, %v251
    %v256 = vsel %vm253, %v249, %v250
    %v257 = vsel %vm253, %v248, %v249
    %v258 = vsel %vm253, %v252, %v248
    %s259 = scalar_lea.vmem %s1, 320
    %v260 = vld [vmem:[%s259] sm:$0xff]
    %v261 = vld [vmem:[%s259 + $0x8] sm:$0xff]
    %v262 = vld [vmem:[%s259 + $0x10] sm:$0xff]
    %v263 = vld [vmem:[%s259 + $0x18] sm:$0xff]
    %v264 = vld [vmem:[%s259 + $0x20] sm:$0xff]
    %v265 = vld [vmem:[%s259 + $0x28] sm:$0xff]
    %v266 = vld [vmem:[%s259 + $0x30] sm:$0xff]
    %v267 = vld [vmem:[%s259 + $0x38] sm:$0xff]
    %v268 = vld [vmem:[%s259 + $0x40] sm:$0xff]
    %v269 = vld [vmem:[%s259 + $0x48] sm:$0xff]
    %v270 = vld [vmem:[%s259 + $0x50] sm:$0xff]
    %v271 = vld [vmem:[%s259 + $0x58] sm:$0xff]
    %v272 = vld [vmem:[%s259 + $0x60] sm:$0xff]
    %v273 = vld [vmem:[%s259 + $0x68] sm:$0xff]
    %v274 = vld [vmem:[%s259 + $0x70] sm:$0xff]
    %v275 = vld [vmem:[%s259 + $0x78] sm:$0xff]
    %v276 = vld [vmem:[%s259 + $0x80] sm:$0xff]
    %v277 = vld [vmem:[%s259 + $0x88] sm:$0xff]
    %v278 = vld [vmem:[%s259 + $0x90] sm:$0xff]
    %v279 = vld [vmem:[%s259 + $0x98] sm:$0xff]
    %v281 = vsel %vm89, %v257, 0
    %v284 = vsel %vm89, %v256, 0
    %v287 = vsel %vm89, %v255, 0
    %v290 = vsel %vm89, %v254, 0
    %v293 = vsel %vm89, %v258, 0
    %295 = vmatpush.msra.mxu0 0.0
    %296 = vmatpush.msra.mxu0 0.0
    %297 = vmatpush.msra.mxu0 0.0
    %298 = vmatpush.msra.mxu0 0.0
    %299 = vmatpush.msra.mxu0 0.0
    %300 = vmatpush.msra.mxu0 0.0
    %301 = vmatpush.msra.mxu0 %v278
    %302 = vmatpush.msra.mxu0 %v276
    %303 = vmatpush.msra.mxu0 %v274
    %304 = vmatpush.msra.mxu0 %v272
    %305 = vmatpush.msra.mxu0 %v270
    %306 = vmatpush.msra.mxu0 %v268
    %307 = vmatpush.msra.mxu0 %v266
    %308 = vmatpush.msra.mxu0 %v264
    %309 = vmatpush.msra.mxu0 %v262
    %310 = vmatpush.msra.mxu0 %v260
    %311 = vmatmul.f32.gmra.mxu0 %v281
    %v312 = vpop.f32.mrf.mxu0
    %v313 = vadd.f32 0.0, %v312
    %314 = vmatmul.f32.gmra.mxu0 %v284
    %v315 = vpop.f32.mrf.mxu0
    %v316 = vadd.f32 0.0, %v315
    %317 = vmatmul.f32.gmra.mxu0 %v287
    %v318 = vpop.f32.mrf.mxu0
    %v319 = vadd.f32 0.0, %v318
    %320 = vmatmul.f32.gmra.mxu0 %v290
    %v321 = vpop.f32.mrf.mxu0
    %v322 = vadd.f32 0.0, %v321
    %323 = vmatmul.f32.gmra.mxu0 %v293
    %v324 = vpop.f32.mrf.mxu0
    %v325 = vadd.f32 0.0, %v324
    %326 = vdwg.mxu0
    %327 = vmatpush.msra.mxu0 0.0
    %328 = vmatpush.msra.mxu0 0.0
    %329 = vmatpush.msra.mxu0 0.0
    %330 = vmatpush.msra.mxu0 0.0
    %331 = vmatpush.msra.mxu0 0.0
    %332 = vmatpush.msra.mxu0 0.0
    %333 = vmatpush.msra.mxu0 %v279
    %334 = vmatpush.msra.mxu0 %v277
    %335 = vmatpush.msra.mxu0 %v275
    %336 = vmatpush.msra.mxu0 %v273
    %337 = vmatpush.msra.mxu0 %v271
    %338 = vmatpush.msra.mxu0 %v269
    %339 = vmatpush.msra.mxu0 %v267
    %340 = vmatpush.msra.mxu0 %v265
    %341 = vmatpush.msra.mxu0 %v263
    %342 = vmatpush.msra.mxu0 %v261
    %343 = vmatmul.f32.gmra.mxu0 %v281
    %v344 = vpop.f32.mrf.mxu0
    %v345 = vadd.f32 0.0, %v344
    %346 = vmatmul.f32.gmra.mxu0 %v284
    %v347 = vpop.f32.mrf.mxu0
    %v348 = vadd.f32 0.0, %v347
    %349 = vmatmul.f32.gmra.mxu0 %v287
    %v350 = vpop.f32.mrf.mxu0
    %v351 = vadd.f32 0.0, %v350
    %352 = vmatmul.f32.gmra.mxu0 %v290
    %v353 = vpop.f32.mrf.mxu0
    %v354 = vadd.f32 0.0, %v353
    %355 = vmatmul.f32.gmra.mxu0 %v293
    %v356 = vpop.f32.mrf.mxu0
    %v357 = vadd.f32 0.0, %v356
    %358 = vdwg.mxu0
    %v359 = vadd.f32 %v202, %v313
    %v360 = vadd.f32 %v234, %v345
    %v361 = vadd.f32 %v205, %v316
    %v362 = vadd.f32 %v237, %v348
    %v363 = vadd.f32 %v208, %v319
    %v364 = vadd.f32 %v240, %v351
    %v365 = vadd.f32 %v211, %v322
    %v366 = vadd.f32 %v243, %v354
    %v367 = vadd.f32 %v214, %v325
    %v368 = vadd.f32 %v246, %v357
    %v369 = vld [vmem:[%s2] sm:$0x3]
    %v371 = vperm.slane %v369, 0
    %v372 = vperm.slane %v369, 1
    %v375 = vadd.f32 %v359, %v371
    %v376 = vadd.f32 %v360, %v372
    %v377 = vadd.f32 %v361, %v371
    %v378 = vadd.f32 %v362, %v372
    %v379 = vadd.f32 %v363, %v371
    %v380 = vadd.f32 %v364, %v372
    %v381 = vadd.f32 %v365, %v371
    %v382 = vadd.f32 %v366, %v372
    %v383 = vadd.f32 %v367, %v371
    %v384 = vadd.f32 %v368, %v372
    %v385 = vmax.f32 %v375, 0.0
    %v386 = vmax.f32 %v376, 0.0
    %v387 = vmax.f32 %v377, 0.0
    %v388 = vmax.f32 %v378, 0.0
    %v389 = vmax.f32 %v379, 0.0
    %v390 = vmax.f32 %v380, 0.0
    %v391 = vmax.f32 %v381, 0.0
    %v392 = vmax.f32 %v382, 0.0
    %v393 = vmax.f32 %v383, 0.0
    %v394 = vmax.f32 %v384, 0.0
    %v395 = vld [vmem:[%s3] sm:$0xff]
    %v396 = vld [vmem:[%s3 + $0x8] sm:$0xff]
    %v397 = vld [vmem:[%s3 + $0x10] sm:$0xff]
    %v398 = vld [vmem:[%s3 + $0x18] sm:$0xff]
    %v399 = vld [vmem:[%s3 + $0x20] sm:$0xff]
    %401 = vset.pattern.permute.xlu0 0
    %402 = vperm.xlu0 %401, %v395
    %v403 = vpop.permute.xlu0 %402
    %406 = vset.pattern.permute.xlu0 0
    %407 = vperm.xlu0 %406, %v396
    %v408 = vpop.permute.xlu0 %407
    %411 = vset.pattern.permute.xlu0 0
    %412 = vperm.xlu0 %411, %v397
    %v413 = vpop.permute.xlu0 %412
    %416 = vset.pattern.permute.xlu0 0
    %417 = vperm.xlu0 %416, %v398
    %v418 = vpop.permute.xlu0 %417
    %421 = vset.pattern.permute.xlu0 0
    %422 = vperm.xlu0 %421, %v399
    %v423 = vpop.permute.xlu0 %422
    %v425 = vmul.f32 %v385, %v403
    %v426 = vmul.f32 %v386, %v403
    %v427 = vmul.f32 %v387, %v408
    %v428 = vmul.f32 %v388, %v408
    %v429 = vmul.f32 %v389, %v413
    %v430 = vmul.f32 %v390, %v413
    %v431 = vmul.f32 %v391, %v418
    %v432 = vmul.f32 %v392, %v418
    %v433 = vmul.f32 %v393, %v423
    %v434 = vmul.f32 %v394, %v423
    %v435 = vld [vmem:[%s4] sm:$0xff]
    %v436 = vld [vmem:[%s4 + $0x8] sm:$0xff]
    %v437 = vld [vmem:[%s4 + $0x10] sm:$0xff]
    %v438 = vld [vmem:[%s4 + $0x18] sm:$0xff]
    %v439 = vld [vmem:[%s4 + $0x20] sm:$0xff]
    %v440 = vld [vmem:[%s4 + $0x28] sm:$0xff]
    %v441 = vld [vmem:[%s4 + $0x30] sm:$0xff]
    %v442 = vld [vmem:[%s4 + $0x38] sm:$0xff]
    %v443 = vld [vmem:[%s4 + $0x40] sm:$0xff]
    %v444 = vld [vmem:[%s4 + $0x48] sm:$0xff]
    %v445 = vld [vmem:[%s4 + $0x50] sm:$0xff]
    %v446 = vld [vmem:[%s4 + $0x58] sm:$0xff]
    %v447 = vld [vmem:[%s4 + $0x60] sm:$0xff]
    %v448 = vld [vmem:[%s4 + $0x68] sm:$0xff]
    %v449 = vld [vmem:[%s4 + $0x70] sm:$0xff]
    %v450 = vld [vmem:[%s4 + $0x78] sm:$0xff]
    %v451 = vld [vmem:[%s4 + $0x80] sm:$0xff]
    %v452 = vld [vmem:[%s4 + $0x88] sm:$0xff]
    %v453 = vld [vmem:[%s4 + $0x90] sm:$0xff]
    %v454 = vld [vmem:[%s4 + $0x98] sm:$0xff]
    %v455 = vld [vmem:[%s4 + $0xa0] sm:$0xff]
    %v456 = vld [vmem:[%s4 + $0xa8] sm:$0xff]
    %v457 = vld [vmem:[%s4 + $0xb0] sm:$0xff]
    %v458 = vld [vmem:[%s4 + $0xb8] sm:$0xff]
    %v459 = vld [vmem:[%s4 + $0xc0] sm:$0xff]
    %v460 = vld [vmem:[%s4 + $0xc8] sm:$0xff]
    %v461 = vld [vmem:[%s4 + $0xd0] sm:$0xff]
    %v462 = vld [vmem:[%s4 + $0xd8] sm:$0xff]
    %v463 = vld [vmem:[%s4 + $0xe0] sm:$0xff]
    %v464 = vld [vmem:[%s4 + $0xe8] sm:$0xff]
    %v465 = vld [vmem:[%s4 + $0xf0] sm:$0xff]
    %v466 = vld [vmem:[%s4 + $0xf8] sm:$0xff]
    %v467 = vld [vmem:[%s4 + $0x100] sm:$0xff]
    %v468 = vld [vmem:[%s4 + $0x108] sm:$0xff]
    %v469 = vld [vmem:[%s4 + $0x110] sm:$0xff]
    %v470 = vld [vmem:[%s4 + $0x118] sm:$0xff]
    %v471 = vld [vmem:[%s4 + $0x120] sm:$0xff]
    %v472 = vld [vmem:[%s4 + $0x128] sm:$0xff]
    %v473 = vld [vmem:[%s4 + $0x130] sm:$0xff]
    %v474 = vld [vmem:[%s4 + $0x138] sm:$0xff]
    %v475 = vld [vmem:[%s4 + $0x140] sm:$0xff]
    %v476 = vld [vmem:[%s4 + $0x148] sm:$0xff]
    %v477 = vld [vmem:[%s4 + $0x150] sm:$0xff]
    %v478 = vld [vmem:[%s4 + $0x158] sm:$0xff]
    %v479 = vld [vmem:[%s4 + $0x160] sm:$0xff]
    %v480 = vld [vmem:[%s4 + $0x168] sm:$0xff]
    %v481 = vld [vmem:[%s4 + $0x170] sm:$0xff]
    %v482 = vld [vmem:[%s4 + $0x178] sm:$0xff]
    %v483 = vld [vmem:[%s4 + $0x180] sm:$0xff]
    %v484 = vld [vmem:[%s4 + $0x188] sm:$0xff]
    %v485 = vld [vmem:[%s4 + $0x190] sm:$0xff]
    %v486 = vld [vmem:[%s4 + $0x198] sm:$0xff]
    %v487 = vld [vmem:[%s4 + $0x1a0] sm:$0xff]
    %v488 = vld [vmem:[%s4 + $0x1a8] sm:$0xff]
    %v489 = vld [vmem:[%s4 + $0x1b0] sm:$0xff]
    %v490 = vld [vmem:[%s4 + $0x1b8] sm:$0xff]
    %v491 = vld [vmem:[%s4 + $0x1c0] sm:$0xff]
    %v492 = vld [vmem:[%s4 + $0x1c8] sm:$0xff]
    %v493 = vld [vmem:[%s4 + $0x1d0] sm:$0xff]
    %v494 = vld [vmem:[%s4 + $0x1d8] sm:$0xff]
    %v495 = vld [vmem:[%s4 + $0x1e0] sm:$0xff]
    %v496 = vld [vmem:[%s4 + $0x1e8] sm:$0xff]
    %v497 = vld [vmem:[%s4 + $0x1f0] sm:$0xff]
    %v498 = vld [vmem:[%s4 + $0x1f8] sm:$0xff]
    %v499 = vld [vmem:[%s4 + $0x200] sm:$0xff]
    %v500 = vld [vmem:[%s4 + $0x208] sm:$0xff]
    %v501 = vld [vmem:[%s4 + $0x210] sm:$0xff]
    %v502 = vld [vmem:[%s4 + $0x218] sm:$0xff]
    %v503 = vld [vmem:[%s4 + $0x220] sm:$0xff]
    %v504 = vld [vmem:[%s4 + $0x228] sm:$0xff]
    %v505 = vld [vmem:[%s4 + $0x230] sm:$0xff]
    %v506 = vld [vmem:[%s4 + $0x238] sm:$0xff]
    %v507 = vrot.slane %v425, 1
    %v508 = vrot.slane %v426, 1
    %v509 = vrot.slane %v427, 1
    %v510 = vrot.slane %v428, 1
    %v511 = vrot.slane %v429, 1
    %v512 = vrot.slane %v430, 1
    %v513 = vrot.slane %v431, 1
    %v514 = vrot.slane %v432, 1
    %v515 = vrot.slane %v433, 1
    %v516 = vrot.slane %v434, 1
    %v517 = vsel %vm62, %v513, %v515
    %v518 = vsel %vm62, %v514, %v516
    %v519 = vsel %vm62, %v511, %v513
    %v520 = vsel %vm62, %v512, %v514
    %v521 = vsel %vm62, %v509, %v511
    %v522 = vsel %vm62, %v510, %v512
    %v523 = vsel %vm62, %v507, %v509
    %v524 = vsel %vm62, %v508, %v510
    %v525 = vsel %vm62, %v515, %v507
    %v526 = vsel %vm62, %v516, %v508
    %s527 = scalar_lea.vmem %s4, 576
    %v528 = vld [vmem:[%s527] sm:$0xff]
    %v529 = vld [vmem:[%s527 + $0x8] sm:$0xff]
    %v530 = vld [vmem:[%s527 + $0x10] sm:$0xff]
    %v531 = vld [vmem:[%s527 + $0x18] sm:$0xff]
    %v532 = vld [vmem:[%s527 + $0x20] sm:$0xff]
    %v533 = vld [vmem:[%s527 + $0x28] sm:$0xff]
    %v534 = vld [vmem:[%s527 + $0x30] sm:$0xff]
    %v535 = vld [vmem:[%s527 + $0x38] sm:$0xff]
    %v536 = vld [vmem:[%s527 + $0x40] sm:$0xff]
    %v537 = vld [vmem:[%s527 + $0x48] sm:$0xff]
    %v538 = vld [vmem:[%s527 + $0x50] sm:$0xff]
    %v539 = vld [vmem:[%s527 + $0x58] sm:$0xff]
    %v540 = vld [vmem:[%s527 + $0x60] sm:$0xff]
    %v541 = vld [vmem:[%s527 + $0x68] sm:$0xff]
    %v542 = vld [vmem:[%s527 + $0x70] sm:$0xff]
    %v543 = vld [vmem:[%s527 + $0x78] sm:$0xff]
    %v544 = vld [vmem:[%s527 + $0x80] sm:$0xff]
    %v545 = vld [vmem:[%s527 + $0x88] sm:$0xff]
    %v546 = vld [vmem:[%s527 + $0x90] sm:$0xff]
    %v547 = vld [vmem:[%s527 + $0x98] sm:$0xff]
    %v548 = vld [vmem:[%s527 + $0xa0] sm:$0xff]
    %v549 = vld [vmem:[%s527 + $0xa8] sm:$0xff]
    %v550 = vld [vmem:[%s527 + $0xb0] sm:$0xff]
    %v551 = vld [vmem:[%s527 + $0xb8] sm:$0xff]
    %v552 = vld [vmem:[%s527 + $0xc0] sm:$0xff]
    %v553 = vld [vmem:[%s527 + $0xc8] sm:$0xff]
    %v554 = vld [vmem:[%s527 + $0xd0] sm:$0xff]
    %v555 = vld [vmem:[%s527 + $0xd8] sm:$0xff]
    %v556 = vld [vmem:[%s527 + $0xe0] sm:$0xff]
    %v557 = vld [vmem:[%s527 + $0xe8] sm:$0xff]
    %v558 = vld [vmem:[%s527 + $0xf0] sm:$0xff]
    %v559 = vld [vmem:[%s527 + $0xf8] sm:$0xff]
    %v560 = vld [vmem:[%s527 + $0x100] sm:$0xff]
    %v561 = vld [vmem:[%s527 + $0x108] sm:$0xff]
    %v562 = vld [vmem:[%s527 + $0x110] sm:$0xff]
    %v563 = vld [vmem:[%s527 + $0x118] sm:$0xff]
    %v564 = vld [vmem:[%s527 + $0x120] sm:$0xff]
    %v565 = vld [vmem:[%s527 + $0x128] sm:$0xff]
    %v566 = vld [vmem:[%s527 + $0x130] sm:$0xff]
    %v567 = vld [vmem:[%s527 + $0x138] sm:$0xff]
    %v568 = vld [vmem:[%s527 + $0x140] sm:$0xff]
    %v569 = vld [vmem:[%s527 + $0x148] sm:$0xff]
    %v570 = vld [vmem:[%s527 + $0x150] sm:$0xff]
    %v571 = vld [vmem:[%s527 + $0x158] sm:$0xff]
    %v572 = vld [vmem:[%s527 + $0x160] sm:$0xff]
    %v573 = vld [vmem:[%s527 + $0x168] sm:$0xff]
    %v574 = vld [vmem:[%s527 + $0x170] sm:$0xff]
    %v575 = vld [vmem:[%s527 + $0x178] sm:$0xff]
    %v576 = vld [vmem:[%s527 + $0x180] sm:$0xff]
    %v577 = vld [vmem:[%s527 + $0x188] sm:$0xff]
    %v578 = vld [vmem:[%s527 + $0x190] sm:$0xff]
    %v579 = vld [vmem:[%s527 + $0x198] sm:$0xff]
    %v580 = vld [vmem:[%s527 + $0x1a0] sm:$0xff]
    %v581 = vld [vmem:[%s527 + $0x1a8] sm:$0xff]
    %v582 = vld [vmem:[%s527 + $0x1b0] sm:$0xff]
    %v583 = vld [vmem:[%s527 + $0x1b8] sm:$0xff]
    %v584 = vld [vmem:[%s527 + $0x1c0] sm:$0xff]
    %v585 = vld [vmem:[%s527 + $0x1c8] sm:$0xff]
    %v586 = vld [vmem:[%s527 + $0x1d0] sm:$0xff]
    %v587 = vld [vmem:[%s527 + $0x1d8] sm:$0xff]
    %v588 = vld [vmem:[%s527 + $0x1e0] sm:$0xff]
    %v589 = vld [vmem:[%s527 + $0x1e8] sm:$0xff]
    %v590 = vld [vmem:[%s527 + $0x1f0] sm:$0xff]
    %v591 = vld [vmem:[%s527 + $0x1f8] sm:$0xff]
    %v592 = vld [vmem:[%s527 + $0x200] sm:$0xff]
    %v593 = vld [vmem:[%s527 + $0x208] sm:$0xff]
    %v594 = vld [vmem:[%s527 + $0x210] sm:$0xff]
    %v595 = vld [vmem:[%s527 + $0x218] sm:$0xff]
    %v596 = vld [vmem:[%s527 + $0x220] sm:$0xff]
    %v597 = vld [vmem:[%s527 + $0x228] sm:$0xff]
    %v598 = vld [vmem:[%s527 + $0x230] sm:$0xff]
    %v599 = vld [vmem:[%s527 + $0x238] sm:$0xff]
    %vm600 = vcmask 130048
    %v602 = vsel %vm600, %v524, 0
    %v605 = vsel %vm600, %v522, 0
    %v608 = vsel %vm600, %v520, 0
    %v611 = vsel %vm600, %v518, 0
    %v614 = vsel %vm600, %v526, 0
    %616 = vmatpush.msra.mxu0 %v588
    %617 = vmatpush.msra.mxu0 %v584
    %618 = vmatpush.msra.mxu0 %v580
    %619 = vmatpush.msra.mxu0 %v576
    %620 = vmatpush.msra.mxu0 %v572
    %621 = vmatpush.msra.mxu0 %v568
    %622 = vmatpush.msra.mxu0 %v564
    %623 = vmatpush.msra.mxu0 %v560
    %624 = vmatpush.msra.mxu0 %v556
    %625 = vmatpush.msra.mxu0 %v552
    %626 = vmatpush.msra.mxu0 %v548
    %627 = vmatpush.msra.mxu0 %v544
    %628 = vmatpush.msra.mxu0 %v540
    %629 = vmatpush.msra.mxu0 %v536
    %630 = vmatpush.msra.mxu0 %v532
    %631 = vmatpush.msra.mxu0 %v528
    %632 = vmatmul.f32.gmra.mxu0 %v523
    %v633 = vpop.f32.mrf.mxu0
    %v634 = vadd.f32 0.0, %v633
    %635 = vmatmul.f32.gmra.mxu0 %v521
    %v636 = vpop.f32.mrf.mxu0
    %v637 = vadd.f32 0.0, %v636
    %638 = vmatmul.f32.gmra.mxu0 %v519
    %v639 = vpop.f32.mrf.mxu0
    %v640 = vadd.f32 0.0, %v639
    %641 = vmatmul.f32.gmra.mxu0 %v517
    %v642 = vpop.f32.mrf.mxu0
    %v643 = vadd.f32 0.0, %v642
    %644 = vmatmul.f32.gmra.mxu0 %v525
    %v645 = vpop.f32.mrf.mxu0
    %v646 = vadd.f32 0.0, %v645
    %647 = vdwg.mxu0
    %648 = vmatpush.msra.mxu0 0.0
    %649 = vmatpush.msra.mxu0 0.0
    %650 = vmatpush.msra.mxu0 0.0
    %651 = vmatpush.msra.mxu0 0.0
    %652 = vmatpush.msra.mxu0 0.0
    %653 = vmatpush.msra.mxu0 0.0
    %654 = vmatpush.msra.mxu0 0.0
    %655 = vmatpush.msra.mxu0 0.0
    %656 = vmatpush.msra.mxu0 0.0
    %657 = vmatpush.msra.mxu0 0.0
    %658 = vmatpush.msra.mxu0 0.0
    %659 = vmatpush.msra.mxu0 0.0
    %660 = vmatpush.msra.mxu0 0.0
    %661 = vmatpush.msra.mxu0 0.0
    %662 = vmatpush.msra.mxu0 %v596
    %663 = vmatpush.msra.mxu0 %v592
    %664 = vmatmul.f32.gmra.mxu0 %v602
    %v665 = vpop.f32.mrf.mxu0
    %v666 = vadd.f32 %v634, %v665
    %667 = vmatmul.f32.gmra.mxu0 %v605
    %v668 = vpop.f32.mrf.mxu0
    %v669 = vadd.f32 %v637, %v668
    %670 = vmatmul.f32.gmra.mxu0 %v608
    %v671 = vpop.f32.mrf.mxu0
    %v672 = vadd.f32 %v640, %v671
    %673 = vmatmul.f32.gmra.mxu0 %v611
    %v674 = vpop.f32.mrf.mxu0
    %v675 = vadd.f32 %v643, %v674
    %676 = vmatmul.f32.gmra.mxu0 %v614
    %v677 = vpop.f32.mrf.mxu0
    %v678 = vadd.f32 %v646, %v677
    %679 = vdwg.mxu0
    %680 = vmatpush.msra.mxu0 %v589
    %681 = vmatpush.msra.mxu0 %v585
    %682 = vmatpush.msra.mxu0 %v581
    %683 = vmatpush.msra.mxu0 %v577
    %684 = vmatpush.msra.mxu0 %v573
    %685 = vmatpush.msra.mxu0 %v569
    %686 = vmatpush.msra.mxu0 %v565
    %687 = vmatpush.msra.mxu0 %v561
    %688 = vmatpush.msra.mxu0 %v557
    %689 = vmatpush.msra.mxu0 %v553
    %690 = vmatpush.msra.mxu0 %v549
    %691 = vmatpush.msra.mxu0 %v545
    %692 = vmatpush.msra.mxu0 %v541
    %693 = vmatpush.msra.mxu0 %v537
    %694 = vmatpush.msra.mxu0 %v533
    %695 = vmatpush.msra.mxu0 %v529
    %696 = vmatmul.f32.gmra.mxu0 %v523
    %v697 = vpop.f32.mrf.mxu0
    %v698 = vadd.f32 0.0, %v697
    %699 = vmatmul.f32.gmra.mxu0 %v521
    %v700 = vpop.f32.mrf.mxu0
    %v701 = vadd.f32 0.0, %v700
    %702 = vmatmul.f32.gmra.mxu0 %v519
    %v703 = vpop.f32.mrf.mxu0
    %v704 = vadd.f32 0.0, %v703
    %705 = vmatmul.f32.gmra.mxu0 %v517
    %v706 = vpop.f32.mrf.mxu0
    %v707 = vadd.f32 0.0, %v706
    %708 = vmatmul.f32.gmra.mxu0 %v525
    %v709 = vpop.f32.mrf.mxu0
    %v710 = vadd.f32 0.0, %v709
    %711 = vdwg.mxu0
    %712 = vmatpush.msra.mxu0 0.0
    %713 = vmatpush.msra.mxu0 0.0
    %714 = vmatpush.msra.mxu0 0.0
    %715 = vmatpush.msra.mxu0 0.0
    %716 = vmatpush.msra.mxu0 0.0
    %717 = vmatpush.msra.mxu0 0.0
    %718 = vmatpush.msra.mxu0 0.0
    %719 = vmatpush.msra.mxu0 0.0
    %720 = vmatpush.msra.mxu0 0.0
    %721 = vmatpush.msra.mxu0 0.0
    %722 = vmatpush.msra.mxu0 0.0
    %723 = vmatpush.msra.mxu0 0.0
    %724 = vmatpush.msra.mxu0 0.0
    %725 = vmatpush.msra.mxu0 0.0
    %726 = vmatpush.msra.mxu0 %v597
    %727 = vmatpush.msra.mxu0 %v593
    %728 = vmatmul.f32.gmra.mxu0 %v602
    %v729 = vpop.f32.mrf.mxu0
    %v730 = vadd.f32 %v698, %v729
    %731 = vmatmul.f32.gmra.mxu0 %v605
    %v732 = vpop.f32.mrf.mxu0
    %v733 = vadd.f32 %v701, %v732
    %734 = vmatmul.f32.gmra.mxu0 %v608
    %v735 = vpop.f32.mrf.mxu0
    %v736 = vadd.f32 %v704, %v735
    %737 = vmatmul.f32.gmra.mxu0 %v611
    %v738 = vpop.f32.mrf.mxu0
    %v739 = vadd.f32 %v707, %v738
    %740 = vmatmul.f32.gmra.mxu0 %v614
    %v741 = vpop.f32.mrf.mxu0
    %v742 = vadd.f32 %v710, %v741
    %743 = vdwg.mxu0
    %744 = vmatpush.msra.mxu0 %v590
    %745 = vmatpush.msra.mxu0 %v586
    %746 = vmatpush.msra.mxu0 %v582
    %747 = vmatpush.msra.mxu0 %v578
    %748 = vmatpush.msra.mxu0 %v574
    %749 = vmatpush.msra.mxu0 %v570
    %750 = vmatpush.msra.mxu0 %v566
    %751 = vmatpush.msra.mxu0 %v562
    %752 = vmatpush.msra.mxu0 %v558
    %753 = vmatpush.msra.mxu0 %v554
    %754 = vmatpush.msra.mxu0 %v550
    %755 = vmatpush.msra.mxu0 %v546
    %756 = vmatpush.msra.mxu0 %v542
    %757 = vmatpush.msra.mxu0 %v538
    %758 = vmatpush.msra.mxu0 %v534
    %759 = vmatpush.msra.mxu0 %v530
    %760 = vmatmul.f32.gmra.mxu0 %v523
    %v761 = vpop.f32.mrf.mxu0
    %v762 = vadd.f32 0.0, %v761
    %763 = vmatmul.f32.gmra.mxu0 %v521
    %v764 = vpop.f32.mrf.mxu0
    %v765 = vadd.f32 0.0, %v764
    %766 = vmatmul.f32.gmra.mxu0 %v519
    %v767 = vpop.f32.mrf.mxu0
    %v768 = vadd.f32 0.0, %v767
    %769 = vmatmul.f32.gmra.mxu0 %v517
    %v770 = vpop.f32.mrf.mxu0
    %v771 = vadd.f32 0.0, %v770
    %772 = vmatmul.f32.gmra.mxu0 %v525
    %v773 = vpop.f32.mrf.mxu0
    %v774 = vadd.f32 0.0, %v773
    %775 = vdwg.mxu0
    %776 = vmatpush.msra.mxu0 0.0
    %777 = vmatpush.msra.mxu0 0.0
    %778 = vmatpush.msra.mxu0 0.0
    %779 = vmatpush.msra.mxu0 0.0
    %780 = vmatpush.msra.mxu0 0.0
    %781 = vmatpush.msra.mxu0 0.0
    %782 = vmatpush.msra.mxu0 0.0
    %783 = vmatpush.msra.mxu0 0.0
    %784 = vmatpush.msra.mxu0 0.0
    %785 = vmatpush.msra.mxu0 0.0
    %786 = vmatpush.msra.mxu0 0.0
    %787 = vmatpush.msra.mxu0 0.0
    %788 = vmatpush.msra.mxu0 0.0
    %789 = vmatpush.msra.mxu0 0.0
    %790 = vmatpush.msra.mxu0 %v598
    %791 = vmatpush.msra.mxu0 %v594
    %792 = vmatmul.f32.gmra.mxu0 %v602
    %v793 = vpop.f32.mrf.mxu0
    %v794 = vadd.f32 %v762, %v793
    %795 = vmatmul.f32.gmra.mxu0 %v605
    %v796 = vpop.f32.mrf.mxu0
    %v797 = vadd.f32 %v765, %v796
    %798 = vmatmul.f32.gmra.mxu0 %v608
    %v799 = vpop.f32.mrf.mxu0
    %v800 = vadd.f32 %v768, %v799
    %801 = vmatmul.f32.gmra.mxu0 %v611
    %v802 = vpop.f32.mrf.mxu0
    %v803 = vadd.f32 %v771, %v802
    %804 = vmatmul.f32.gmra.mxu0 %v614
    %v805 = vpop.f32.mrf.mxu0
    %v806 = vadd.f32 %v774, %v805
    %807 = vdwg.mxu0
    %808 = vmatpush.msra.mxu0 %v591
    %809 = vmatpush.msra.mxu0 %v587
    %810 = vmatpush.msra.mxu0 %v583
    %811 = vmatpush.msra.mxu0 %v579
    %812 = vmatpush.msra.mxu0 %v575
    %813 = vmatpush.msra.mxu0 %v571
    %814 = vmatpush.msra.mxu0 %v567
    %815 = vmatpush.msra.mxu0 %v563
    %816 = vmatpush.msra.mxu0 %v559
    %817 = vmatpush.msra.mxu0 %v555
    %818 = vmatpush.msra.mxu0 %v551
    %819 = vmatpush.msra.mxu0 %v547
    %820 = vmatpush.msra.mxu0 %v543
    %821 = vmatpush.msra.mxu0 %v539
    %822 = vmatpush.msra.mxu0 %v535
    %823 = vmatpush.msra.mxu0 %v531
    %824 = vmatmul.f32.gmra.mxu0 %v523
    %v825 = vpop.f32.mrf.mxu0
    %v826 = vadd.f32 0.0, %v825
    %827 = vmatmul.f32.gmra.mxu0 %v521
    %v828 = vpop.f32.mrf.mxu0
    %v829 = vadd.f32 0.0, %v828
    %830 = vmatmul.f32.gmra.mxu0 %v519
    %v831 = vpop.f32.mrf.mxu0
    %v832 = vadd.f32 0.0, %v831
    %833 = vmatmul.f32.gmra.mxu0 %v517
    %v834 = vpop.f32.mrf.mxu0
    %v835 = vadd.f32 0.0, %v834
    %836 = vmatmul.f32.gmra.mxu0 %v525
    %v837 = vpop.f32.mrf.mxu0
    %v838 = vadd.f32 0.0, %v837
    %839 = vdwg.mxu0
    %840 = vmatpush.msra.mxu0 0.0
    %841 = vmatpush.msra.mxu0 0.0
    %842 = vmatpush.msra.mxu0 0.0
    %843 = vmatpush.msra.mxu0 0.0
    %844 = vmatpush.msra.mxu0 0.0
    %845 = vmatpush.msra.mxu0 0.0
    %846 = vmatpush.msra.mxu0 0.0
    %847 = vmatpush.msra.mxu0 0.0
    %848 = vmatpush.msra.mxu0 0.0
    %849 = vmatpush.msra.mxu0 0.0
    %850 = vmatpush.msra.mxu0 0.0
    %851 = vmatpush.msra.mxu0 0.0
    %852 = vmatpush.msra.mxu0 0.0
    %853 = vmatpush.msra.mxu0 0.0
    %854 = vmatpush.msra.mxu0 %v599
    %855 = vmatpush.msra.mxu0 %v595
    %856 = vmatmul.f32.gmra.mxu0 %v602
    %v857 = vpop.f32.mrf.mxu0
    %v858 = vadd.f32 %v826, %v857
    %859 = vmatmul.f32.gmra.mxu0 %v605
    %v860 = vpop.f32.mrf.mxu0
    %v861 = vadd.f32 %v829, %v860
    %862 = vmatmul.f32.gmra.mxu0 %v608
    %v863 = vpop.f32.mrf.mxu0
    %v864 = vadd.f32 %v832, %v863
    %865 = vmatmul.f32.gmra.mxu0 %v611
    %v866 = vpop.f32.mrf.mxu0
    %v867 = vadd.f32 %v835, %v866
    %868 = vmatmul.f32.gmra.mxu0 %v614
    %v869 = vpop.f32.mrf.mxu0
    %v870 = vadd.f32 %v838, %v869
    %871 = vdwg.mxu0
    %v873 = vsel %vm600, %v426, 0
    %v876 = vsel %vm600, %v428, 0
    %v879 = vsel %vm600, %v430, 0
    %v882 = vsel %vm600, %v432, 0
    %v885 = vsel %vm600, %v434, 0
    %887 = vmatpush.msra.mxu0 %v495
    %888 = vmatpush.msra.mxu0 %v491
    %889 = vmatpush.msra.mxu0 %v487
    %890 = vmatpush.msra.mxu0 %v483
    %891 = vmatpush.msra.mxu0 %v479
    %892 = vmatpush.msra.mxu0 %v475
    %893 = vmatpush.msra.mxu0 %v471
    %894 = vmatpush.msra.mxu0 %v467
    %895 = vmatpush.msra.mxu0 %v463
    %896 = vmatpush.msra.mxu0 %v459
    %897 = vmatpush.msra.mxu0 %v455
    %898 = vmatpush.msra.mxu0 %v451
    %899 = vmatpush.msra.mxu0 %v447
    %900 = vmatpush.msra.mxu0 %v443
    %901 = vmatpush.msra.mxu0 %v439
    %902 = vmatpush.msra.mxu0 %v435
    %903 = vmatmul.f32.gmra.mxu0 %v425
    %v904 = vpop.f32.mrf.mxu0
    %v905 = vadd.f32 %v666, %v904
    %906 = vmatmul.f32.gmra.mxu0 %v427
    %v907 = vpop.f32.mrf.mxu0
    %v908 = vadd.f32 %v669, %v907
    %909 = vmatmul.f32.gmra.mxu0 %v429
    %v910 = vpop.f32.mrf.mxu0
    %v911 = vadd.f32 %v672, %v910
    %912 = vmatmul.f32.gmra.mxu0 %v431
    %v913 = vpop.f32.mrf.mxu0
    %v914 = vadd.f32 %v675, %v913
    %915 = vmatmul.f32.gmra.mxu0 %v433
    %v916 = vpop.f32.mrf.mxu0
    %v917 = vadd.f32 %v678, %v916
    %918 = vdwg.mxu0
    %919 = vmatpush.msra.mxu0 0.0
    %920 = vmatpush.msra.mxu0 0.0
    %921 = vmatpush.msra.mxu0 0.0
    %922 = vmatpush.msra.mxu0 0.0
    %923 = vmatpush.msra.mxu0 0.0
    %924 = vmatpush.msra.mxu0 0.0
    %925 = vmatpush.msra.mxu0 0.0
    %926 = vmatpush.msra.mxu0 0.0
    %927 = vmatpush.msra.mxu0 0.0
    %928 = vmatpush.msra.mxu0 0.0
    %929 = vmatpush.msra.mxu0 0.0
    %930 = vmatpush.msra.mxu0 0.0
    %931 = vmatpush.msra.mxu0 0.0
    %932 = vmatpush.msra.mxu0 0.0
    %933 = vmatpush.msra.mxu0 %v503
    %934 = vmatpush.msra.mxu0 %v499
    %935 = vmatmul.f32.gmra.mxu0 %v873
    %v936 = vpop.f32.mrf.mxu0
    %v937 = vadd.f32 %v905, %v936
    %938 = vmatmul.f32.gmra.mxu0 %v876
    %v939 = vpop.f32.mrf.mxu0
    %v940 = vadd.f32 %v908, %v939
    %941 = vmatmul.f32.gmra.mxu0 %v879
    %v942 = vpop.f32.mrf.mxu0
    %v943 = vadd.f32 %v911, %v942
    %944 = vmatmul.f32.gmra.mxu0 %v882
    %v945 = vpop.f32.mrf.mxu0
    %v946 = vadd.f32 %v914, %v945
    %947 = vmatmul.f32.gmra.mxu0 %v885
    %v948 = vpop.f32.mrf.mxu0
    %v949 = vadd.f32 %v917, %v948
    %950 = vdwg.mxu0
    %951 = vmatpush.msra.mxu0 %v496
    %952 = vmatpush.msra.mxu0 %v492
    %953 = vmatpush.msra.mxu0 %v488
    %954 = vmatpush.msra.mxu0 %v484
    %955 = vmatpush.msra.mxu0 %v480
    %956 = vmatpush.msra.mxu0 %v476
    %957 = vmatpush.msra.mxu0 %v472
    %958 = vmatpush.msra.mxu0 %v468
    %959 = vmatpush.msra.mxu0 %v464
    %960 = vmatpush.msra.mxu0 %v460
    %961 = vmatpush.msra.mxu0 %v456
    %962 = vmatpush.msra.mxu0 %v452
    %963 = vmatpush.msra.mxu0 %v448
    %964 = vmatpush.msra.mxu0 %v444
    %965 = vmatpush.msra.mxu0 %v440
    %966 = vmatpush.msra.mxu0 %v436
    %967 = vmatmul.f32.gmra.mxu0 %v425
    %v968 = vpop.f32.mrf.mxu0
    %v969 = vadd.f32 %v730, %v968
    %970 = vmatmul.f32.gmra.mxu0 %v427
    %v971 = vpop.f32.mrf.mxu0
    %v972 = vadd.f32 %v733, %v971
    %973 = vmatmul.f32.gmra.mxu0 %v429
    %v974 = vpop.f32.mrf.mxu0
    %v975 = vadd.f32 %v736, %v974
    %976 = vmatmul.f32.gmra.mxu0 %v431
    %v977 = vpop.f32.mrf.mxu0
    %v978 = vadd.f32 %v739, %v977
    %979 = vmatmul.f32.gmra.mxu0 %v433
    %v980 = vpop.f32.mrf.mxu0
    %v981 = vadd.f32 %v742, %v980
    %982 = vdwg.mxu0
    %983 = vmatpush.msra.mxu0 0.0
    %984 = vmatpush.msra.mxu0 0.0
    %985 = vmatpush.msra.mxu0 0.0
    %986 = vmatpush.msra.mxu0 0.0
    %987 = vmatpush.msra.mxu0 0.0
    %988 = vmatpush.msra.mxu0 0.0
    %989 = vmatpush.msra.mxu0 0.0
    %990 = vmatpush.msra.mxu0 0.0
    %991 = vmatpush.msra.mxu0 0.0
    %992 = vmatpush.msra.mxu0 0.0
    %993 = vmatpush.msra.mxu0 0.0
    %994 = vmatpush.msra.mxu0 0.0
    %995 = vmatpush.msra.mxu0 0.0
    %996 = vmatpush.msra.mxu0 0.0
    %997 = vmatpush.msra.mxu0 %v504
    %998 = vmatpush.msra.mxu0 %v500
    %999 = vmatmul.f32.gmra.mxu0 %v873
    %v1000 = vpop.f32.mrf.mxu0
    %v1001 = vadd.f32 %v969, %v1000
    %1002 = vmatmul.f32.gmra.mxu0 %v876
    %v1003 = vpop.f32.mrf.mxu0
    %v1004 = vadd.f32 %v972, %v1003
    %1005 = vmatmul.f32.gmra.mxu0 %v879
    %v1006 = vpop.f32.mrf.mxu0
    %v1007 = vadd.f32 %v975, %v1006
    %1008 = vmatmul.f32.gmra.mxu0 %v882
    %v1009 = vpop.f32.mrf.mxu0
    %v1010 = vadd.f32 %v978, %v1009
    %1011 = vmatmul.f32.gmra.mxu0 %v885
    %v1012 = vpop.f32.mrf.mxu0
    %v1013 = vadd.f32 %v981, %v1012
    %1014 = vdwg.mxu0
    %1015 = vmatpush.msra.mxu0 %v497
    %1016 = vmatpush.msra.mxu0 %v493
    %1017 = vmatpush.msra.mxu0 %v489
    %1018 = vmatpush.msra.mxu0 %v485
    %1019 = vmatpush.msra.mxu0 %v481
    %1020 = vmatpush.msra.mxu0 %v477
    %1021 = vmatpush.msra.mxu0 %v473
    %1022 = vmatpush.msra.mxu0 %v469
    %1023 = vmatpush.msra.mxu0 %v465
    %1024 = vmatpush.msra.mxu0 %v461
    %1025 = vmatpush.msra.mxu0 %v457
    %1026 = vmatpush.msra.mxu0 %v453
    %1027 = vmatpush.msra.mxu0 %v449
    %1028 = vmatpush.msra.mxu0 %v445
    %1029 = vmatpush.msra.mxu0 %v441
    %1030 = vmatpush.msra.mxu0 %v437
    %1031 = vmatmul.f32.gmra.mxu0 %v425
    %v1032 = vpop.f32.mrf.mxu0
    %v1033 = vadd.f32 %v794, %v1032
    %1034 = vmatmul.f32.gmra.mxu0 %v427
    %v1035 = vpop.f32.mrf.mxu0
    %v1036 = vadd.f32 %v797, %v1035
    %1037 = vmatmul.f32.gmra.mxu0 %v429
    %v1038 = vpop.f32.mrf.mxu0
    %v1039 = vadd.f32 %v800, %v1038
    %1040 = vmatmul.f32.gmra.mxu0 %v431
    %v1041 = vpop.f32.mrf.mxu0
    %v1042 = vadd.f32 %v803, %v1041
    %1043 = vmatmul.f32.gmra.mxu0 %v433
    %v1044 = vpop.f32.mrf.mxu0
    %v1045 = vadd.f32 %v806, %v1044
    %1046 = vdwg.mxu0
    %1047 = vmatpush.msra.mxu0 0.0
    %1048 = vmatpush.msra.mxu0 0.0
    %1049 = vmatpush.msra.mxu0 0.0
    %1050 = vmatpush.msra.mxu0 0.0
    %1051 = vmatpush.msra.mxu0 0.0
    %1052 = vmatpush.msra.mxu0 0.0
    %1053 = vmatpush.msra.mxu0 0.0
    %1054 = vmatpush.msra.mxu0 0.0
    %1055 = vmatpush.msra.mxu0 0.0
    %1056 = vmatpush.msra.mxu0 0.0
    %1057 = vmatpush.msra.mxu0 0.0
    %1058 = vmatpush.msra.mxu0 0.0
    %1059 = vmatpush.msra.mxu0 0.0
    %1060 = vmatpush.msra.mxu0 0.0
    %1061 = vmatpush.msra.mxu0 %v505
    %1062 = vmatpush.msra.mxu0 %v501
    %1063 = vmatmul.f32.gmra.mxu0 %v873
    %v1064 = vpop.f32.mrf.mxu0
    %v1065 = vadd.f32 %v1033, %v1064
    %1066 = vmatmul.f32.gmra.mxu0 %v876
    %v1067 = vpop.f32.mrf.mxu0
    %v1068 = vadd.f32 %v1036, %v1067
    %1069 = vmatmul.f32.gmra.mxu0 %v879
    %v1070 = vpop.f32.mrf.mxu0
    %v1071 = vadd.f32 %v1039, %v1070
    %1072 = vmatmul.f32.gmra.mxu0 %v882
    %v1073 = vpop.f32.mrf.mxu0
    %v1074 = vadd.f32 %v1042, %v1073
    %1075 = vmatmul.f32.gmra.mxu0 %v885
    %v1076 = vpop.f32.mrf.mxu0
    %v1077 = vadd.f32 %v1045, %v1076
    %1078 = vdwg.mxu0
    %1079 = vmatpush.msra.mxu0 %v498
    %1080 = vmatpush.msra.mxu0 %v494
    %1081 = vmatpush.msra.mxu0 %v490
    %1082 = vmatpush.msra.mxu0 %v486
    %1083 = vmatpush.msra.mxu0 %v482
    %1084 = vmatpush.msra.mxu0 %v478
    %1085 = vmatpush.msra.mxu0 %v474
    %1086 = vmatpush.msra.mxu0 %v470
    %1087 = vmatpush.msra.mxu0 %v466
    %1088 = vmatpush.msra.mxu0 %v462
    %1089 = vmatpush.msra.mxu0 %v458
    %1090 = vmatpush.msra.mxu0 %v454
    %1091 = vmatpush.msra.mxu0 %v450
    %1092 = vmatpush.msra.mxu0 %v446
    %1093 = vmatpush.msra.mxu0 %v442
    %1094 = vmatpush.msra.mxu0 %v438
    %1095 = vmatmul.f32.gmra.mxu0 %v425
    %v1096 = vpop.f32.mrf.mxu0
    %v1097 = vadd.f32 %v858, %v1096
    %1098 = vmatmul.f32.gmra.mxu0 %v427
    %v1099 = vpop.f32.mrf.mxu0
    %v1100 = vadd.f32 %v861, %v1099
    %1101 = vmatmul.f32.gmra.mxu0 %v429
    %v1102 = vpop.f32.mrf.mxu0
    %v1103 = vadd.f32 %v864, %v1102
    %1104 = vmatmul.f32.gmra.mxu0 %v431
    %v1105 = vpop.f32.mrf.mxu0
    %v1106 = vadd.f32 %v867, %v1105
    %1107 = vmatmul.f32.gmra.mxu0 %v433
    %v1108 = vpop.f32.mrf.mxu0
    %v1109 = vadd.f32 %v870, %v1108
    %1110 = vdwg.mxu0
    %1111 = vmatpush.msra.mxu0 0.0
    %1112 = vmatpush.msra.mxu0 0.0
    %1113 = vmatpush.msra.mxu0 0.0
    %1114 = vmatpush.msra.mxu0 0.0
    %1115 = vmatpush.msra.mxu0 0.0
    %1116 = vmatpush.msra.mxu0 0.0
    %1117 = vmatpush.msra.mxu0 0.0
    %1118 = vmatpush.msra.mxu0 0.0
    %1119 = vmatpush.msra.mxu0 0.0
    %1120 = vmatpush.msra.mxu0 0.0
    %1121 = vmatpush.msra.mxu0 0.0
    %1122 = vmatpush.msra.mxu0 0.0
    %1123 = vmatpush.msra.mxu0 0.0
    %1124 = vmatpush.msra.mxu0 0.0
    %1125 = vmatpush.msra.mxu0 %v506
    %1126 = vmatpush.msra.mxu0 %v502
    %1127 = vmatmul.f32.gmra.mxu0 %v873
    %v1128 = vpop.f32.mrf.mxu0
    %v1129 = vadd.f32 %v1097, %v1128
    %1130 = vmatmul.f32.gmra.mxu0 %v876
    %v1131 = vpop.f32.mrf.mxu0
    %v1132 = vadd.f32 %v1100, %v1131
    %1133 = vmatmul.f32.gmra.mxu0 %v879
    %v1134 = vpop.f32.mrf.mxu0
    %v1135 = vadd.f32 %v1103, %v1134
    %1136 = vmatmul.f32.gmra.mxu0 %v882
    %v1137 = vpop.f32.mrf.mxu0
    %v1138 = vadd.f32 %v1106, %v1137
    %1139 = vmatmul.f32.gmra.mxu0 %v885
    %v1140 = vpop.f32.mrf.mxu0
    %v1141 = vadd.f32 %v1109, %v1140
    %1142 = vdwg.mxu0
    %v1143 = vrot.slane %v425, 2
    %v1144 = vrot.slane %v426, 2
    %v1145 = vrot.slane %v427, 2
    %v1146 = vrot.slane %v428, 2
    %v1147 = vrot.slane %v429, 2
    %v1148 = vrot.slane %v430, 2
    %v1149 = vrot.slane %v431, 2
    %v1150 = vrot.slane %v432, 2
    %v1151 = vrot.slane %v433, 2
    %v1152 = vrot.slane %v434, 2
    %v1153 = vsel %vm253, %v1149, %v1151
    %v1154 = vsel %vm253, %v1150, %v1152
    %v1155 = vsel %vm253, %v1147, %v1149
    %v1156 = vsel %vm253, %v1148, %v1150
    %v1157 = vsel %vm253, %v1145, %v1147
    %v1158 = vsel %vm253, %v1146, %v1148
    %v1159 = vsel %vm253, %v1143, %v1145
    %v1160 = vsel %vm253, %v1144, %v1146
    %v1161 = vsel %vm253, %v1151, %v1143
    %v1162 = vsel %vm253, %v1152, %v1144
    %s1163 = scalar_lea.vmem %s4, 1152
    %v1164 = vld [vmem:[%s1163] sm:$0xff]
    %v1165 = vld [vmem:[%s1163 + $0x8] sm:$0xff]
    %v1166 = vld [vmem:[%s1163 + $0x10] sm:$0xff]
    %v1167 = vld [vmem:[%s1163 + $0x18] sm:$0xff]
    %v1168 = vld [vmem:[%s1163 + $0x20] sm:$0xff]
    %v1169 = vld [vmem:[%s1163 + $0x28] sm:$0xff]
    %v1170 = vld [vmem:[%s1163 + $0x30] sm:$0xff]
    %v1171 = vld [vmem:[%s1163 + $0x38] sm:$0xff]
    %v1172 = vld [vmem:[%s1163 + $0x40] sm:$0xff]
    %v1173 = vld [vmem:[%s1163 + $0x48] sm:$0xff]
    %v1174 = vld [vmem:[%s1163 + $0x50] sm:$0xff]
    %v1175 = vld [vmem:[%s1163 + $0x58] sm:$0xff]
    %v1176 = vld [vmem:[%s1163 + $0x60] sm:$0xff]
    %v1177 = vld [vmem:[%s1163 + $0x68] sm:$0xff]
    %v1178 = vld [vmem:[%s1163 + $0x70] sm:$0xff]
    %v1179 = vld [vmem:[%s1163 + $0x78] sm:$0xff]
    %v1180 = vld [vmem:[%s1163 + $0x80] sm:$0xff]
    %v1181 = vld [vmem:[%s1163 + $0x88] sm:$0xff]
    %v1182 = vld [vmem:[%s1163 + $0x90] sm:$0xff]
    %v1183 = vld [vmem:[%s1163 + $0x98] sm:$0xff]
    %v1184 = vld [vmem:[%s1163 + $0xa0] sm:$0xff]
    %v1185 = vld [vmem:[%s1163 + $0xa8] sm:$0xff]
    %v1186 = vld [vmem:[%s1163 + $0xb0] sm:$0xff]
    %v1187 = vld [vmem:[%s1163 + $0xb8] sm:$0xff]
    %v1188 = vld [vmem:[%s1163 + $0xc0] sm:$0xff]
    %v1189 = vld [vmem:[%s1163 + $0xc8] sm:$0xff]
    %v1190 = vld [vmem:[%s1163 + $0xd0] sm:$0xff]
    %v1191 = vld [vmem:[%s1163 + $0xd8] sm:$0xff]
    %v1192 = vld [vmem:[%s1163 + $0xe0] sm:$0xff]
    %v1193 = vld [vmem:[%s1163 + $0xe8] sm:$0xff]
    %v1194 = vld [vmem:[%s1163 + $0xf0] sm:$0xff]
    %v1195 = vld [vmem:[%s1163 + $0xf8] sm:$0xff]
    %v1196 = vld [vmem:[%s1163 + $0x100] sm:$0xff]
    %v1197 = vld [vmem:[%s1163 + $0x108] sm:$0xff]
    %v1198 = vld [vmem:[%s1163 + $0x110] sm:$0xff]
    %v1199 = vld [vmem:[%s1163 + $0x118] sm:$0xff]
    %v1200 = vld [vmem:[%s1163 + $0x120] sm:$0xff]
    %v1201 = vld [vmem:[%s1163 + $0x128] sm:$0xff]
    %v1202 = vld [vmem:[%s1163 + $0x130] sm:$0xff]
    %v1203 = vld [vmem:[%s1163 + $0x138] sm:$0xff]
    %v1204 = vld [vmem:[%s1163 + $0x140] sm:$0xff]
    %v1205 = vld [vmem:[%s1163 + $0x148] sm:$0xff]
    %v1206 = vld [vmem:[%s1163 + $0x150] sm:$0xff]
    %v1207 = vld [vmem:[%s1163 + $0x158] sm:$0xff]
    %v1208 = vld [vmem:[%s1163 + $0x160] sm:$0xff]
    %v1209 = vld [vmem:[%s1163 + $0x168] sm:$0xff]
    %v1210 = vld [vmem:[%s1163 + $0x170] sm:$0xff]
    %v1211 = vld [vmem:[%s1163 + $0x178] sm:$0xff]
    %v1212 = vld [vmem:[%s1163 + $0x180] sm:$0xff]
    %v1213 = vld [vmem:[%s1163 + $0x188] sm:$0xff]
    %v1214 = vld [vmem:[%s1163 + $0x190] sm:$0xff]
    %v1215 = vld [vmem:[%s1163 + $0x198] sm:$0xff]
    %v1216 = vld [vmem:[%s1163 + $0x1a0] sm:$0xff]
    %v1217 = vld [vmem:[%s1163 + $0x1a8] sm:$0xff]
    %v1218 = vld [vmem:[%s1163 + $0x1b0] sm:$0xff]
    %v1219 = vld [vmem:[%s1163 + $0x1b8] sm:$0xff]
    %v1220 = vld [vmem:[%s1163 + $0x1c0] sm:$0xff]
    %v1221 = vld [vmem:[%s1163 + $0x1c8] sm:$0xff]
    %v1222 = vld [vmem:[%s1163 + $0x1d0] sm:$0xff]
    %v1223 = vld [vmem:[%s1163 + $0x1d8] sm:$0xff]
    %v1224 = vld [vmem:[%s1163 + $0x1e0] sm:$0xff]
    %v1225 = vld [vmem:[%s1163 + $0x1e8] sm:$0xff]
    %v1226 = vld [vmem:[%s1163 + $0x1f0] sm:$0xff]
    %v1227 = vld [vmem:[%s1163 + $0x1f8] sm:$0xff]
    %v1228 = vld [vmem:[%s1163 + $0x200] sm:$0xff]
    %v1229 = vld [vmem:[%s1163 + $0x208] sm:$0xff]
    %v1230 = vld [vmem:[%s1163 + $0x210] sm:$0xff]
    %v1231 = vld [vmem:[%s1163 + $0x218] sm:$0xff]
    %v1232 = vld [vmem:[%s1163 + $0x220] sm:$0xff]
    %v1233 = vld [vmem:[%s1163 + $0x228] sm:$0xff]
    %v1234 = vld [vmem:[%s1163 + $0x230] sm:$0xff]
    %v1235 = vld [vmem:[%s1163 + $0x238] sm:$0xff]
    %v1237 = vsel %vm600, %v1160, 0
    %v1240 = vsel %vm600, %v1158, 0
    %v1243 = vsel %vm600, %v1156, 0
    %v1246 = vsel %vm600, %v1154, 0
    %v1249 = vsel %vm600, %v1162, 0
    %1251 = vmatpush.msra.mxu0 %v1224
    %1252 = vmatpush.msra.mxu0 %v1220
    %1253 = vmatpush.msra.mxu0 %v1216
    %1254 = vmatpush.msra.mxu0 %v1212
    %1255 = vmatpush.msra.mxu0 %v1208
    %1256 = vmatpush.msra.mxu0 %v1204
    %1257 = vmatpush.msra.mxu0 %v1200
    %1258 = vmatpush.msra.mxu0 %v1196
    %1259 = vmatpush.msra.mxu0 %v1192
    %1260 = vmatpush.msra.mxu0 %v1188
    %1261 = vmatpush.msra.mxu0 %v1184
    %1262 = vmatpush.msra.mxu0 %v1180
    %1263 = vmatpush.msra.mxu0 %v1176
    %1264 = vmatpush.msra.mxu0 %v1172
    %1265 = vmatpush.msra.mxu0 %v1168
    %1266 = vmatpush.msra.mxu0 %v1164
    %1267 = vmatmul.f32.gmra.mxu0 %v1159
    %v1268 = vpop.f32.mrf.mxu0
    %v1269 = vadd.f32 0.0, %v1268
    %1270 = vmatmul.f32.gmra.mxu0 %v1157
    %v1271 = vpop.f32.mrf.mxu0
    %v1272 = vadd.f32 0.0, %v1271
    %1273 = vmatmul.f32.gmra.mxu0 %v1155
    %v1274 = vpop.f32.mrf.mxu0
    %v1275 = vadd.f32 0.0, %v1274
    %1276 = vmatmul.f32.gmra.mxu0 %v1153
    %v1277 = vpop.f32.mrf.mxu0
    %v1278 = vadd.f32 0.0, %v1277
    %1279 = vmatmul.f32.gmra.mxu0 %v1161
    %v1280 = vpop.f32.mrf.mxu0
    %v1281 = vadd.f32 0.0, %v1280
    %1282 = vdwg.mxu0
    %1283 = vmatpush.msra.mxu0 0.0
    %1284 = vmatpush.msra.mxu0 0.0
    %1285 = vmatpush.msra.mxu0 0.0
    %1286 = vmatpush.msra.mxu0 0.0
    %1287 = vmatpush.msra.mxu0 0.0
    %1288 = vmatpush.msra.mxu0 0.0
    %1289 = vmatpush.msra.mxu0 0.0
    %1290 = vmatpush.msra.mxu0 0.0
    %1291 = vmatpush.msra.mxu0 0.0
    %1292 = vmatpush.msra.mxu0 0.0
    %1293 = vmatpush.msra.mxu0 0.0
    %1294 = vmatpush.msra.mxu0 0.0
    %1295 = vmatpush.msra.mxu0 0.0
    %1296 = vmatpush.msra.mxu0 0.0
    %1297 = vmatpush.msra.mxu0 %v1232
    %1298 = vmatpush.msra.mxu0 %v1228
    %1299 = vmatmul.f32.gmra.mxu0 %v1237
    %v1300 = vpop.f32.mrf.mxu0
    %v1301 = vadd.f32 %v1269, %v1300
    %1302 = vmatmul.f32.gmra.mxu0 %v1240
    %v1303 = vpop.f32.mrf.mxu0
    %v1304 = vadd.f32 %v1272, %v1303
    %1305 = vmatmul.f32.gmra.mxu0 %v1243
    %v1306 = vpop.f32.mrf.mxu0
    %v1307 = vadd.f32 %v1275, %v1306
    %1308 = vmatmul.f32.gmra.mxu0 %v1246
    %v1309 = vpop.f32.mrf.mxu0
    %v1310 = vadd.f32 %v1278, %v1309
    %1311 = vmatmul.f32.gmra.mxu0 %v1249
    %v1312 = vpop.f32.mrf.mxu0
    %v1313 = vadd.f32 %v1281, %v1312
    %1314 = vdwg.mxu0
    %1315 = vmatpush.msra.mxu0 %v1225
    %1316 = vmatpush.msra.mxu0 %v1221
    %1317 = vmatpush.msra.mxu0 %v1217
    %1318 = vmatpush.msra.mxu0 %v1213
    %1319 = vmatpush.msra.mxu0 %v1209
    %1320 = vmatpush.msra.mxu0 %v1205
    %1321 = vmatpush.msra.mxu0 %v1201
    %1322 = vmatpush.msra.mxu0 %v1197
    %1323 = vmatpush.msra.mxu0 %v1193
    %1324 = vmatpush.msra.mxu0 %v1189
    %1325 = vmatpush.msra.mxu0 %v1185
    %1326 = vmatpush.msra.mxu0 %v1181
    %1327 = vmatpush.msra.mxu0 %v1177
    %1328 = vmatpush.msra.mxu0 %v1173
    %1329 = vmatpush.msra.mxu0 %v1169
    %1330 = vmatpush.msra.mxu0 %v1165
    %1331 = vmatmul.f32.gmra.mxu0 %v1159
    %v1332 = vpop.f32.mrf.mxu0
    %v1333 = vadd.f32 0.0, %v1332
    %1334 = vmatmul.f32.gmra.mxu0 %v1157
    %v1335 = vpop.f32.mrf.mxu0
    %v1336 = vadd.f32 0.0, %v1335
    %1337 = vmatmul.f32.gmra.mxu0 %v1155
    %v1338 = vpop.f32.mrf.mxu0
    %v1339 = vadd.f32 0.0, %v1338
    %1340 = vmatmul.f32.gmra.mxu0 %v1153
    %v1341 = vpop.f32.mrf.mxu0
    %v1342 = vadd.f32 0.0, %v1341
    %1343 = vmatmul.f32.gmra.mxu0 %v1161
    %v1344 = vpop.f32.mrf.mxu0
    %v1345 = vadd.f32 0.0, %v1344
    %1346 = vdwg.mxu0
    %1347 = vmatpush.msra.mxu0 0.0
    %1348 = vmatpush.msra.mxu0 0.0
    %1349 = vmatpush.msra.mxu0 0.0
    %1350 = vmatpush.msra.mxu0 0.0
    %1351 = vmatpush.msra.mxu0 0.0
    %1352 = vmatpush.msra.mxu0 0.0
    %1353 = vmatpush.msra.mxu0 0.0
    %1354 = vmatpush.msra.mxu0 0.0
    %1355 = vmatpush.msra.mxu0 0.0
    %1356 = vmatpush.msra.mxu0 0.0
    %1357 = vmatpush.msra.mxu0 0.0
    %1358 = vmatpush.msra.mxu0 0.0
    %1359 = vmatpush.msra.mxu0 0.0
    %1360 = vmatpush.msra.mxu0 0.0
    %1361 = vmatpush.msra.mxu0 %v1233
    %1362 = vmatpush.msra.mxu0 %v1229
    %1363 = vmatmul.f32.gmra.mxu0 %v1237
    %v1364 = vpop.f32.mrf.mxu0
    %v1365 = vadd.f32 %v1333, %v1364
    %1366 = vmatmul.f32.gmra.mxu0 %v1240
    %v1367 = vpop.f32.mrf.mxu0
    %v1368 = vadd.f32 %v1336, %v1367
    %1369 = vmatmul.f32.gmra.mxu0 %v1243
    %v1370 = vpop.f32.mrf.mxu0
    %v1371 = vadd.f32 %v1339, %v1370
    %1372 = vmatmul.f32.gmra.mxu0 %v1246
    %v1373 = vpop.f32.mrf.mxu0
    %v1374 = vadd.f32 %v1342, %v1373
    %1375 = vmatmul.f32.gmra.mxu0 %v1249
    %v1376 = vpop.f32.mrf.mxu0
    %v1377 = vadd.f32 %v1345, %v1376
    %1378 = vdwg.mxu0
    %1379 = vmatpush.msra.mxu0 %v1226
    %1380 = vmatpush.msra.mxu0 %v1222
    %1381 = vmatpush.msra.mxu0 %v1218
    %1382 = vmatpush.msra.mxu0 %v1214
    %1383 = vmatpush.msra.mxu0 %v1210
    %1384 = vmatpush.msra.mxu0 %v1206
    %1385 = vmatpush.msra.mxu0 %v1202
    %1386 = vmatpush.msra.mxu0 %v1198
    %1387 = vmatpush.msra.mxu0 %v1194
    %1388 = vmatpush.msra.mxu0 %v1190
    %1389 = vmatpush.msra.mxu0 %v1186
    %1390 = vmatpush.msra.mxu0 %v1182
    %1391 = vmatpush.msra.mxu0 %v1178
    %1392 = vmatpush.msra.mxu0 %v1174
    %1393 = vmatpush.msra.mxu0 %v1170
    %1394 = vmatpush.msra.mxu0 %v1166
    %1395 = vmatmul.f32.gmra.mxu0 %v1159
    %v1396 = vpop.f32.mrf.mxu0
    %v1397 = vadd.f32 0.0, %v1396
    %1398 = vmatmul.f32.gmra.mxu0 %v1157
    %v1399 = vpop.f32.mrf.mxu0
    %v1400 = vadd.f32 0.0, %v1399
    %1401 = vmatmul.f32.gmra.mxu0 %v1155
    %v1402 = vpop.f32.mrf.mxu0
    %v1403 = vadd.f32 0.0, %v1402
    %1404 = vmatmul.f32.gmra.mxu0 %v1153
    %v1405 = vpop.f32.mrf.mxu0
    %v1406 = vadd.f32 0.0, %v1405
    %1407 = vmatmul.f32.gmra.mxu0 %v1161
    %v1408 = vpop.f32.mrf.mxu0
    %v1409 = vadd.f32 0.0, %v1408
    %1410 = vdwg.mxu0
    %1411 = vmatpush.msra.mxu0 0.0
    %1412 = vmatpush.msra.mxu0 0.0
    %1413 = vmatpush.msra.mxu0 0.0
    %1414 = vmatpush.msra.mxu0 0.0
    %1415 = vmatpush.msra.mxu0 0.0
    %1416 = vmatpush.msra.mxu0 0.0
    %1417 = vmatpush.msra.mxu0 0.0
    %1418 = vmatpush.msra.mxu0 0.0
    %1419 = vmatpush.msra.mxu0 0.0
    %1420 = vmatpush.msra.mxu0 0.0
    %1421 = vmatpush.msra.mxu0 0.0
    %1422 = vmatpush.msra.mxu0 0.0
    %1423 = vmatpush.msra.mxu0 0.0
    %1424 = vmatpush.msra.mxu0 0.0
    %1425 = vmatpush.msra.mxu0 %v1234
    %1426 = vmatpush.msra.mxu0 %v1230
    %1427 = vmatmul.f32.gmra.mxu0 %v1237
    %v1428 = vpop.f32.mrf.mxu0
    %v1429 = vadd.f32 %v1397, %v1428
    %1430 = vmatmul.f32.gmra.mxu0 %v1240
    %v1431 = vpop.f32.mrf.mxu0
    %v1432 = vadd.f32 %v1400, %v1431
    %1433 = vmatmul.f32.gmra.mxu0 %v1243
    %v1434 = vpop.f32.mrf.mxu0
    %v1435 = vadd.f32 %v1403, %v1434
    %1436 = vmatmul.f32.gmra.mxu0 %v1246
    %v1437 = vpop.f32.mrf.mxu0
    %v1438 = vadd.f32 %v1406, %v1437
    %1439 = vmatmul.f32.gmra.mxu0 %v1249
    %v1440 = vpop.f32.mrf.mxu0
    %v1441 = vadd.f32 %v1409, %v1440
    %1442 = vdwg.mxu0
    %1443 = vmatpush.msra.mxu0 %v1227
    %1444 = vmatpush.msra.mxu0 %v1223
    %1445 = vmatpush.msra.mxu0 %v1219
    %1446 = vmatpush.msra.mxu0 %v1215
    %1447 = vmatpush.msra.mxu0 %v1211
    %1448 = vmatpush.msra.mxu0 %v1207
    %1449 = vmatpush.msra.mxu0 %v1203
    %1450 = vmatpush.msra.mxu0 %v1199
    %1451 = vmatpush.msra.mxu0 %v1195
    %1452 = vmatpush.msra.mxu0 %v1191
    %1453 = vmatpush.msra.mxu0 %v1187
    %1454 = vmatpush.msra.mxu0 %v1183
    %1455 = vmatpush.msra.mxu0 %v1179
    %1456 = vmatpush.msra.mxu0 %v1175
    %1457 = vmatpush.msra.mxu0 %v1171
    %1458 = vmatpush.msra.mxu0 %v1167
    %1459 = vmatmul.f32.gmra.mxu0 %v1159
    %v1460 = vpop.f32.mrf.mxu0
    %v1461 = vadd.f32 0.0, %v1460
    %1462 = vmatmul.f32.gmra.mxu0 %v1157
    %v1463 = vpop.f32.mrf.mxu0
    %v1464 = vadd.f32 0.0, %v1463
    %1465 = vmatmul.f32.gmra.mxu0 %v1155
    %v1466 = vpop.f32.mrf.mxu0
    %v1467 = vadd.f32 0.0, %v1466
    %1468 = vmatmul.f32.gmra.mxu0 %v1153
    %v1469 = vpop.f32.mrf.mxu0
    %v1470 = vadd.f32 0.0, %v1469
    %1471 = vmatmul.f32.gmra.mxu0 %v1161
    %v1472 = vpop.f32.mrf.mxu0
    %v1473 = vadd.f32 0.0, %v1472
    %1474 = vdwg.mxu0
    %1475 = vmatpush.msra.mxu0 0.0
    %1476 = vmatpush.msra.mxu0 0.0
    %1477 = vmatpush.msra.mxu0 0.0
    %1478 = vmatpush.msra.mxu0 0.0
    %1479 = vmatpush.msra.mxu0 0.0
    %1480 = vmatpush.msra.mxu0 0.0
    %1481 = vmatpush.msra.mxu0 0.0
    %1482 = vmatpush.msra.mxu0 0.0
    %1483 = vmatpush.msra.mxu0 0.0
    %1484 = vmatpush.msra.mxu0 0.0
    %1485 = vmatpush.msra.mxu0 0.0
    %1486 = vmatpush.msra.mxu0 0.0
    %1487 = vmatpush.msra.mxu0 0.0
    %1488 = vmatpush.msra.mxu0 0.0
    %1489 = vmatpush.msra.mxu0 %v1235
    %1490 = vmatpush.msra.mxu0 %v1231
    %1491 = vmatmul.f32.gmra.mxu0 %v1237
    %v1492 = vpop.f32.mrf.mxu0
    %v1493 = vadd.f32 %v1461, %v1492
    %1494 = vmatmul.f32.gmra.mxu0 %v1240
    %v1495 = vpop.f32.mrf.mxu0
    %v1496 = vadd.f32 %v1464, %v1495
    %1497 = vmatmul.f32.gmra.mxu0 %v1243
    %v1498 = vpop.f32.mrf.mxu0
    %v1499 = vadd.f32 %v1467, %v1498
    %1500 = vmatmul.f32.gmra.mxu0 %v1246
    %v1501 = vpop.f32.mrf.mxu0
    %v1502 = vadd.f32 %v1470, %v1501
    %1503 = vmatmul.f32.gmra.mxu0 %v1249
    %v1504 = vpop.f32.mrf.mxu0
    %v1505 = vadd.f32 %v1473, %v1504
    %1506 = vdwg.mxu0
    %v1507 = vadd.f32 %v937, %v1301
    %v1508 = vadd.f32 %v1001, %v1365
    %v1509 = vadd.f32 %v1065, %v1429
    %v1510 = vadd.f32 %v1129, %v1493
    %v1511 = vadd.f32 %v940, %v1304
    %v1512 = vadd.f32 %v1004, %v1368
    %v1513 = vadd.f32 %v1068, %v1432
    %v1514 = vadd.f32 %v1132, %v1496
    %v1515 = vadd.f32 %v943, %v1307
    %v1516 = vadd.f32 %v1007, %v1371
    %v1517 = vadd.f32 %v1071, %v1435
    %v1518 = vadd.f32 %v1135, %v1499
    %v1519 = vadd.f32 %v946, %v1310
    %v1520 = vadd.f32 %v1010, %v1374
    %v1521 = vadd.f32 %v1074, %v1438
    %v1522 = vadd.f32 %v1138, %v1502
    %v1523 = vadd.f32 %v949, %v1313
    %v1524 = vadd.f32 %v1013, %v1377
    %v1525 = vadd.f32 %v1077, %v1441
    %v1526 = vadd.f32 %v1141, %v1505
    %v1527 = vld [vmem:[%s5] sm:$0xf]
    %v1529 = vperm.slane %v1527, 0
    %v1530 = vperm.slane %v1527, 1
    %v1531 = vperm.slane %v1527, 2
    %v1532 = vperm.slane %v1527, 3
    %v1537 = vadd.f32 %v1507, %v1529
    %v1538 = vadd.f32 %v1508, %v1530
    %v1539 = vadd.f32 %v1509, %v1531
    %v1540 = vadd.f32 %v1510, %v1532
    %v1541 = vadd.f32 %v1511, %v1529
    %v1542 = vadd.f32 %v1512, %v1530
    %v1543 = vadd.f32 %v1513, %v1531
    %v1544 = vadd.f32 %v1514, %v1532
    %v1545 = vadd.f32 %v1515, %v1529
    %v1546 = vadd.f32 %v1516, %v1530
    %v1547 = vadd.f32 %v1517, %v1531
    %v1548 = vadd.f32 %v1518, %v1532
    %v1549 = vadd.f32 %v1519, %v1529
    %v1550 = vadd.f32 %v1520, %v1530
    %v1551 = vadd.f32 %v1521, %v1531
    %v1552 = vadd.f32 %v1522, %v1532
    %v1553 = vadd.f32 %v1523, %v1529
    %v1554 = vadd.f32 %v1524, %v1530
    %v1555 = vadd.f32 %v1525, %v1531
    %v1556 = vadd.f32 %v1526, %v1532
    %v1557 = vmax.f32 %v1537, 0.0
    %v1558 = vmax.f32 %v1538, 0.0
    %v1559 = vmax.f32 %v1539, 0.0
    %v1560 = vmax.f32 %v1540, 0.0
    %v1561 = vmax.f32 %v1541, 0.0
    %v1562 = vmax.f32 %v1542, 0.0
    %v1563 = vmax.f32 %v1543, 0.0
    %v1564 = vmax.f32 %v1544, 0.0
    %v1565 = vmax.f32 %v1545, 0.0
    %v1566 = vmax.f32 %v1546, 0.0
    %v1567 = vmax.f32 %v1547, 0.0
    %v1568 = vmax.f32 %v1548, 0.0
    %v1569 = vmax.f32 %v1549, 0.0
    %v1570 = vmax.f32 %v1550, 0.0
    %v1571 = vmax.f32 %v1551, 0.0
    %v1572 = vmax.f32 %v1552, 0.0
    %v1573 = vmax.f32 %v1553, 0.0
    %v1574 = vmax.f32 %v1554, 0.0
    %v1575 = vmax.f32 %v1555, 0.0
    %v1576 = vmax.f32 %v1556, 0.0
    %v1577 = vld [vmem:[%s6] sm:$0xff]
    %vm1578 = vcmask 326656
    %v1580 = vsel %vm1578, %v1577, 0
    %1582 = vmatpush.msra.mxu0 0.0
    %1583 = vmatpush.msra.mxu0 0.0
    %1584 = vmatpush.msra.mxu0 0.0
    %1585 = vmatpush.msra.mxu0 0.0
    %1586 = vmatpush.msra.mxu0 0.0
    %1587 = vmatpush.msra.mxu0 0.0
    %1588 = vmatpush.msra.mxu0 0.0
    %1589 = vmatpush.msra.mxu0 0.0
    %1590 = vmatpush.msra.mxu0 0.0
    %1591 = vmatpush.msra.mxu0 0.0
    %1592 = vmatpush.msra.mxu0 0.0
    %1593 = vmatpush.msra.mxu0 %v1573
    %1594 = vmatpush.msra.mxu0 %v1569
    %1595 = vmatpush.msra.mxu0 %v1565
    %1596 = vmatpush.msra.mxu0 %v1561
    %1597 = vmatpush.msra.mxu0 %v1557
    %1598 = vmatmul.f32.gmra.mxu0 %v1580
    %v1599 = vpop.f32.mrf.mxu0
    %v1600 = vadd.f32 0.0, %v1599
    %1601 = vdwg.mxu0
    %1602 = vmatpush.msra.mxu0 0.0
    %1603 = vmatpush.msra.mxu0 0.0
    %1604 = vmatpush.msra.mxu0 0.0
    %1605 = vmatpush.msra.mxu0 0.0
    %1606 = vmatpush.msra.mxu0 0.0
    %1607 = vmatpush.msra.mxu0 0.0
    %1608 = vmatpush.msra.mxu0 0.0
    %1609 = vmatpush.msra.mxu0 0.0
    %1610 = vmatpush.msra.mxu0 0.0
    %1611 = vmatpush.msra.mxu0 0.0
    %1612 = vmatpush.msra.mxu0 0.0
    %1613 = vmatpush.msra.mxu0 %v1574
    %1614 = vmatpush.msra.mxu0 %v1570
    %1615 = vmatpush.msra.mxu0 %v1566
    %1616 = vmatpush.msra.mxu0 %v1562
    %1617 = vmatpush.msra.mxu0 %v1558
    %1618 = vmatmul.f32.gmra.mxu0 %v1580
    %v1619 = vpop.f32.mrf.mxu0
    %v1620 = vadd.f32 0.0, %v1619
    %1621 = vdwg.mxu0
    %1622 = vmatpush.msra.mxu0 0.0
    %1623 = vmatpush.msra.mxu0 0.0
    %1624 = vmatpush.msra.mxu0 0.0
    %1625 = vmatpush.msra.mxu0 0.0
    %1626 = vmatpush.msra.mxu0 0.0
    %1627 = vmatpush.msra.mxu0 0.0
    %1628 = vmatpush.msra.mxu0 0.0
    %1629 = vmatpush.msra.mxu0 0.0
    %1630 = vmatpush.msra.mxu0 0.0
    %1631 = vmatpush.msra.mxu0 0.0
    %1632 = vmatpush.msra.mxu0 0.0
    %1633 = vmatpush.msra.mxu0 %v1575
    %1634 = vmatpush.msra.mxu0 %v1571
    %1635 = vmatpush.msra.mxu0 %v1567
    %1636 = vmatpush.msra.mxu0 %v1563
    %1637 = vmatpush.msra.mxu0 %v1559
    %1638 = vmatmul.f32.gmra.mxu0 %v1580
    %v1639 = vpop.f32.mrf.mxu0
    %v1640 = vadd.f32 0.0, %v1639
    %1641 = vdwg.mxu0
    %1642 = vmatpush.msra.mxu0 0.0
    %1643 = vmatpush.msra.mxu0 0.0
    %1644 = vmatpush.msra.mxu0 0.0
    %1645 = vmatpush.msra.mxu0 0.0
    %1646 = vmatpush.msra.mxu0 0.0
    %1647 = vmatpush.msra.mxu0 0.0
    %1648 = vmatpush.msra.mxu0 0.0
    %1649 = vmatpush.msra.mxu0 0.0
    %1650 = vmatpush.msra.mxu0 0.0
    %1651 = vmatpush.msra.mxu0 0.0
    %1652 = vmatpush.msra.mxu0 0.0
    %1653 = vmatpush.msra.mxu0 %v1576
    %1654 = vmatpush.msra.mxu0 %v1572
    %1655 = vmatpush.msra.mxu0 %v1568
    %1656 = vmatpush.msra.mxu0 %v1564
    %1657 = vmatpush.msra.mxu0 %v1560
    %1658 = vmatmul.f32.gmra.mxu0 %v1580
    %v1659 = vpop.f32.mrf.mxu0
    %v1660 = vadd.f32 0.0, %v1659
    %1661 = vdwg.mxu0
    %v1662 = vld [vmem:[%s7] sm:$0xff]
    %v1663 = vld [vmem:[%s7 + $0x8] sm:$0xff]
    %v1664 = vld [vmem:[%s7 + $0x10] sm:$0xff]
    %v1665 = vld [vmem:[%s7 + $0x18] sm:$0xff]
    %v1666 = vld [vmem:[%s7 + $0x20] sm:$0xff]
    %v1667 = vld [vmem:[%s7 + $0x28] sm:$0xff]
    %v1668 = vld [vmem:[%s7 + $0x30] sm:$0xff]
    %v1669 = vld [vmem:[%s7 + $0x38] sm:$0xff]
    %v1670 = vld [vmem:[%s7 + $0x40] sm:$0xff]
    %v1671 = vld [vmem:[%s7 + $0x48] sm:$0xff]
    %v1672 = vld [vmem:[%s7 + $0x50] sm:$0xff]
    %v1673 = vld [vmem:[%s7 + $0x58] sm:$0xff]
    %v1674 = vld [vmem:[%s7 + $0x60] sm:$0xff]
    %v1675 = vld [vmem:[%s7 + $0x68] sm:$0xff]
    %v1676 = vld [vmem:[%s7 + $0x70] sm:$0xff]
    %v1677 = vld [vmem:[%s7 + $0x78] sm:$0xff]
    %v1678 = vld [vmem:[%s7 + $0x80] sm:$0xff]
    %v1679 = vld [vmem:[%s7 + $0x88] sm:$0xff]
    %v1680 = vld [vmem:[%s7 + $0x90] sm:$0xff]
    %v1681 = vld [vmem:[%s7 + $0x98] sm:$0xff]
    %v1682 = vld [vmem:[%s7 + $0xa0] sm:$0xff]
    %v1683 = vld [vmem:[%s7 + $0xa8] sm:$0xff]
    %v1684 = vld [vmem:[%s7 + $0xb0] sm:$0xff]
    %v1685 = vld [vmem:[%s7 + $0xb8] sm:$0xff]
    %v1686 = vld [vmem:[%s7 + $0xc0] sm:$0xff]
    %v1687 = vld [vmem:[%s7 + $0xc8] sm:$0xff]
    %v1688 = vld [vmem:[%s7 + $0xd0] sm:$0xff]
    %v1689 = vld [vmem:[%s7 + $0xd8] sm:$0xff]
    %v1690 = vld [vmem:[%s7 + $0xe0] sm:$0xff]
    %v1691 = vld [vmem:[%s7 + $0xe8] sm:$0xff]
    %v1692 = vld [vmem:[%s7 + $0xf0] sm:$0xff]
    %v1693 = vld [vmem:[%s7 + $0xf8] sm:$0xff]
    %v1694 = vld [vmem:[%s7 + $0x100] sm:$0xff]
    %v1695 = vld [vmem:[%s7 + $0x108] sm:$0xff]
    %v1696 = vld [vmem:[%s7 + $0x110] sm:$0xff]
    %v1697 = vld [vmem:[%s7 + $0x118] sm:$0xff]
    %v1698 = vld [vmem:[%s7 + $0x120] sm:$0xff]
    %v1699 = vld [vmem:[%s7 + $0x128] sm:$0xff]
    %v1700 = vld [vmem:[%s7 + $0x130] sm:$0xff]
    %v1701 = vld [vmem:[%s7 + $0x138] sm:$0xff]
    %v1702 = vld [vmem:[%s7 + $0x140] sm:$0xff]
    %v1703 = vld [vmem:[%s7 + $0x148] sm:$0xff]
    %v1704 = vld [vmem:[%s7 + $0x150] sm:$0xff]
    %v1705 = vld [vmem:[%s7 + $0x158] sm:$0xff]
    %v1706 = vld [vmem:[%s7 + $0x160] sm:$0xff]
    %v1707 = vld [vmem:[%s7 + $0x168] sm:$0xff]
    %v1708 = vld [vmem:[%s7 + $0x170] sm:$0xff]
    %v1709 = vld [vmem:[%s7 + $0x178] sm:$0xff]
    %v1710 = vld [vmem:[%s7 + $0x180] sm:$0xff]
    %v1711 = vld [vmem:[%s7 + $0x188] sm:$0xff]
    %v1712 = vld [vmem:[%s7 + $0x190] sm:$0xff]
    %v1713 = vld [vmem:[%s7 + $0x198] sm:$0xff]
    %v1714 = vld [vmem:[%s7 + $0x1a0] sm:$0xff]
    %v1715 = vld [vmem:[%s7 + $0x1a8] sm:$0xff]
    %v1716 = vld [vmem:[%s7 + $0x1b0] sm:$0xff]
    %v1717 = vld [vmem:[%s7 + $0x1b8] sm:$0xff]
    %v1718 = vld [vmem:[%s7 + $0x1c0] sm:$0xff]
    %v1719 = vld [vmem:[%s7 + $0x1c8] sm:$0xff]
    %v1720 = vld [vmem:[%s7 + $0x1d0] sm:$0xff]
    %v1721 = vld [vmem:[%s7 + $0x1d8] sm:$0xff]
    %v1722 = vld [vmem:[%s7 + $0x1e0] sm:$0xff]
    %v1723 = vld [vmem:[%s7 + $0x1e8] sm:$0xff]
    %v1724 = vld [vmem:[%s7 + $0x1f0] sm:$0xff]
    %v1725 = vld [vmem:[%s7 + $0x1f8] sm:$0xff]
    %1726 = vmatpush.msra.mxu0 %v1677
    %1727 = vmatpush.msra.mxu0 %v1676
    %1728 = vmatpush.msra.mxu0 %v1675
    %1729 = vmatpush.msra.mxu0 %v1674
    %1730 = vmatpush.msra.mxu0 %v1673
    %1731 = vmatpush.msra.mxu0 %v1672
    %1732 = vmatpush.msra.mxu0 %v1671
    %1733 = vmatpush.msra.mxu0 %v1670
    %1734 = vmatpush.msra.mxu0 %v1669
    %1735 = vmatpush.msra.mxu0 %v1668
    %1736 = vmatpush.msra.mxu0 %v1667
    %1737 = vmatpush.msra.mxu0 %v1666
    %1738 = vmatpush.msra.mxu0 %v1665
    %1739 = vmatpush.msra.mxu0 %v1664
    %1740 = vmatpush.msra.mxu0 %v1663
    %1741 = vmatpush.msra.mxu0 %v1662
    %1742 = vmatmul.f32.gmra.mxu0 %v1600
    %v1743 = vpop.f32.mrf.mxu0
    %v1744 = vadd.f32 0.0, %v1743
    %1745 = vdwg.mxu0
    %1746 = vmatpush.msra.mxu0 %v1693
    %1747 = vmatpush.msra.mxu0 %v1692
    %1748 = vmatpush.msra.mxu0 %v1691
    %1749 = vmatpush.msra.mxu0 %v1690
    %1750 = vmatpush.msra.mxu0 %v1689
    %1751 = vmatpush.msra.mxu0 %v1688
    %1752 = vmatpush.msra.mxu0 %v1687
    %1753 = vmatpush.msra.mxu0 %v1686
    %1754 = vmatpush.msra.mxu0 %v1685
    %1755 = vmatpush.msra.mxu0 %v1684
    %1756 = vmatpush.msra.mxu0 %v1683
    %1757 = vmatpush.msra.mxu0 %v1682
    %1758 = vmatpush.msra.mxu0 %v1681
    %1759 = vmatpush.msra.mxu0 %v1680
    %1760 = vmatpush.msra.mxu0 %v1679
    %1761 = vmatpush.msra.mxu0 %v1678
    %1762 = vmatmul.f32.gmra.mxu0 %v1620
    %v1763 = vpop.f32.mrf.mxu0
    %v1764 = vadd.f32 %v1744, %v1763
    %1765 = vdwg.mxu0
    %1766 = vmatpush.msra.mxu0 %v1709
    %1767 = vmatpush.msra.mxu0 %v1708
    %1768 = vmatpush.msra.mxu0 %v1707
    %1769 = vmatpush.msra.mxu0 %v1706
    %1770 = vmatpush.msra.mxu0 %v1705
    %1771 = vmatpush.msra.mxu0 %v1704
    %1772 = vmatpush.msra.mxu0 %v1703
    %1773 = vmatpush.msra.mxu0 %v1702
    %1774 = vmatpush.msra.mxu0 %v1701
    %1775 = vmatpush.msra.mxu0 %v1700
    %1776 = vmatpush.msra.mxu0 %v1699
    %1777 = vmatpush.msra.mxu0 %v1698
    %1778 = vmatpush.msra.mxu0 %v1697
    %1779 = vmatpush.msra.mxu0 %v1696
    %1780 = vmatpush.msra.mxu0 %v1695
    %1781 = vmatpush.msra.mxu0 %v1694
    %1782 = vmatmul.f32.gmra.mxu0 %v1640
    %v1783 = vpop.f32.mrf.mxu0
    %v1784 = vadd.f32 %v1764, %v1783
    %1785 = vdwg.mxu0
    %1786 = vmatpush.msra.mxu0 %v1725
    %1787 = vmatpush.msra.mxu0 %v1724
    %1788 = vmatpush.msra.mxu0 %v1723
    %1789 = vmatpush.msra.mxu0 %v1722
    %1790 = vmatpush.msra.mxu0 %v1721
    %1791 = vmatpush.msra.mxu0 %v1720
    %1792 = vmatpush.msra.mxu0 %v1719
    %1793 = vmatpush.msra.mxu0 %v1718
    %1794 = vmatpush.msra.mxu0 %v1717
    %1795 = vmatpush.msra.mxu0 %v1716
    %1796 = vmatpush.msra.mxu0 %v1715
    %1797 = vmatpush.msra.mxu0 %v1714
    %1798 = vmatpush.msra.mxu0 %v1713
    %1799 = vmatpush.msra.mxu0 %v1712
    %1800 = vmatpush.msra.mxu0 %v1711
    %1801 = vmatpush.msra.mxu0 %v1710
    %1802 = vmatmul.f32.gmra.mxu0 %v1660
    %v1803 = vpop.f32.mrf.mxu0
    %v1804 = vadd.f32 %v1784, %v1803
    %1805 = vdwg.mxu0
    %vm1806 = vcmask 254976
    %1807 = vst.msk [vmem:[#allocation2] sm:$0x3] %vm1806, %v1804
    // Predicated region
    $region34: #{feature_encoder_forward.1} parent=1 // pred_check
      _
    $region35: #{feature_encoder_forward.1} parent=1 // pred_check_branch
      %1809 = sbr.rel (0) target = $region37
    $region36: #{feature_encoder_forward.1} parent=1 // pred_region
      %1811 = vsyncadd [#allocation3], 0
      %s1813 = sshll.u32 [#allocation2], 4
      %s1814 = int_to_ptr.vmem [resolvable:$true] %s1813
      %s1815 = sshll.u32 %s8, 4
      %s1816 = int_to_ptr.hbm [resolvable:$true] %s1815
      %1818 = dma.vmem_to_hbm [thread:$0]  %s1814, 32, %s1816, [#allocation3]
    $region37: #{feature_encoder_forward.1} parent=1 // pred_fallthru
      _
    // Predicated region
    $region38: #{feature_encoder_forward.1} parent=1 // pred_check
      _
    $region39: #{feature_encoder_forward.1} parent=1 // pred_check_branch
      %1820 = sbr.rel (0) target = $region41
    $region40: #{feature_encoder_forward.1} parent=1 // pred_region
      %1822 = dma.done [#allocation3], 32
    $region41: #{feature_encoder_forward.1} parent=1 // pred_fallthru
      _
    %1823 = vsyncpa [#allocation3], 1

</llo_original>
